<compile_context>
chip_gen: v7x
topology: tpu7x:2x2x1
jax: 0.10.0
libtpu: 0.0.40
codegen_flags: <defaults>
</compile_context>

<pallas_src>
import jax
import jax.numpy as jnp
from jax.experimental import pallas as pl
from jax.experimental.pallas import tpu as pltpu


OUT_LANES = 128  # lane-dense padded output width; result lives in column 0


# ----------------------------- fused kernel ----------------------------------
def _make_fused_kernel(num_layers: int, seq_len: int, batch: int, hidden: int):
    """Builds a kernel running the full LSTM stack + classifier in one grid step.

    Ref order: x, W_ih0^T, W_hh0^T, b0, [W_cat_l, b_l for l=1..L-1], W_cls(T,H),
               b_cls, out.
    """

    def kernel(*refs):
        x_ref, wih0_ref, whh0_ref, b0_ref = refs[0], refs[1], refs[2], refs[3]
        idx = 4
        deep_refs = []
        for _ in range(num_layers - 1):
            deep_refs.append((refs[idx], refs[idx + 1]))
            idx += 2
        wcls_ref, bcls_ref, out_ref = refs[idx], refs[idx + 1], refs[idx + 2]

        T, B, H = seq_len, batch, hidden

        # Hoisted layer-0 input projection: one (T*B, E) @ (E, 4H) matmul.
        xp = (jnp.dot(x_ref[...], wih0_ref[...],
                      preferred_element_type=jnp.float32)
              + b0_ref[...])                                       # (T*B, 4H)

        whh0 = whh0_ref[...]                                       # (H, 4H)
        deep_w = [(w_ref[...], b_ref[...]) for (w_ref, b_ref) in deep_refs]
        wcls = wcls_ref[...]                                       # (T, H)

        def lstm_cell(gates, c_prev):
            # PyTorch gate order along 4H: i, f, g, o
            i_g = jax.nn.sigmoid(gates[:, 0 * H:1 * H])
            f_g = jax.nn.sigmoid(gates[:, 1 * H:2 * H])
            g_g = jnp.tanh(gates[:, 2 * H:3 * H])
            o_g = jax.nn.sigmoid(gates[:, 3 * H:4 * H])
            c_new = f_g * c_prev + i_g * g_g
            h_new = o_g * jnp.tanh(c_new)
            return h_new, c_new

        zeros = jnp.zeros((B, H), jnp.float32)
        h = [zeros] * num_layers          # PyTorch hidden=None -> zero init
        c = [zeros] * num_layers
        acc = zeros                       # classifier partial products

        # T is static -> loop fully unrolled at trace time; all slices static.
        for t in range(T):
            # ---- layer 0: only the recurrent matmul on the critical path ----
            g0 = xp[t * B:(t + 1) * B, :] + jnp.dot(
                h[0], whh0, preferred_element_type=jnp.float32)
            h[0], c[0] = lstm_cell(g0, c[0])

            # ---- deeper layers: single fused [W_ih; W_hh] matmul per step ----
            for l in range(1, num_layers):
                w_cat, b_l = deep_w[l - 1]
                inp = jnp.concatenate([h[l - 1], h[l]], axis=1)     # (B, 2H)
                g_l = jnp.dot(inp, w_cat,
                              preferred_element_type=jnp.float32) + b_l
                h[l], c[l] = lstm_cell(g_l, c[l])

            # ---- fused classifier: flat feature index is t*H + j ----
            acc = acc + h[num_layers - 1] * wcls[t:t + 1, :]

        logit = jnp.sum(acc, axis=1, keepdims=True) + bcls_ref[...]  # (B, 1)
        prob = jax.nn.sigmoid(logit)
        # Lane-dense (unmasked) store: broadcast across all 128 lanes.
        out_ref[...] = jnp.broadcast_to(prob, out_ref.shape).astype(out_ref.dtype)

    return kernel


def lstm_net_fused(x_tbe_flat, params):
    """x_tbe_flat: (T*B, E) time-major flattened embeddings -> (B, 1) probs."""
    num_layers = len(params["deep_layers"]) + 1
    hidden = params["w_hh0_t"].shape[0]
    seq_len = params["cls_w_th"].shape[0]
    batch = x_tbe_flat.shape[0] // seq_len

    inputs = [x_tbe_flat, params["w_ih0_t"], params["w_hh0_t"], params["b0"]]
    for (w_cat, b_l) in params["deep_layers"]:
        inputs += [w_cat, b_l]
    inputs += [params["cls_w_th"], params["cls_b"]]

    kernel = _make_fused_kernel(num_layers, seq_len, batch, hidden)
    out_padded = pl.pallas_call(
        kernel,
        out_shape=jax.ShapeDtypeStruct((batch, OUT_LANES), jnp.float32),
        in_specs=[pl.BlockSpec(memory_space=pltpu.MemorySpace.VMEM)
                  for _ in inputs],
        out_specs=pl.BlockSpec(memory_space=pltpu.MemorySpace.VMEM),
    )(*inputs)
    return out_padded[:, :1]                                       # (B, 1)


# ----------------------------- full forward ----------------------------------
@jax.jit
def lstm_net_forward(token_ids, params):
    B, T = token_ids.shape
    # Embedding lookup (fixed table; pure gather -> plain-JAX glue).
    emb = jnp.take(params["embedding"], token_ids, axis=0)          # (B, T, E)
    # Time-major flatten so the hoisted projection is one big matmul.
    x = jnp.transpose(emb, (1, 0, 2)).reshape(T * B, -1)            # (T*B, E)
    # Dropout (inter-layer 0.2 and classifier 0.5) is identity at inference.
    return lstm_net_fused(x, params)                                # (B, 1)


# ----------------------------- param init (deterministic) --------------------
def init_params(key, vocab_size, embedding_dim, hidden_dim, num_layers, seq_len):
    keys = iter(jax.random.split(key, 3 + 4 * num_layers))

    embedding = jax.random.normal(next(keys), (vocab_size, embedding_dim),
                                  jnp.float32)

    bound = 1.0 / (hidden_dim ** 0.5)

    def uni(shape):
        return jax.random.uniform(next(keys), shape, jnp.float32, -bound, bound)

    # Layer 0 kept split (input dim E may differ from H); projection is hoisted.
    w_ih0 = uni((4 * hidden_dim, embedding_dim))
    w_hh0 = uni((4 * hidden_dim, hidden_dim))
    b0 = uni((4 * hidden_dim,)) + uni((4 * hidden_dim,))            # b_ih + b_hh

    deep_layers = []
    for _ in range(1, num_layers):
        w_ih = uni((4 * hidden_dim, hidden_dim))
        w_hh = uni((4 * hidden_dim, hidden_dim))
        b_ih = uni((4 * hidden_dim,))
        b_hh = uni((4 * hidden_dim,))
        # Fused [W_ih; W_hh]^T -> (2H, 4H) for a single per-step matmul.
        w_cat = jnp.concatenate([jnp.transpose(w_ih), jnp.transpose(w_hh)],
                                axis=0)
        deep_layers.append((w_cat, (b_ih + b_hh).reshape(1, 4 * hidden_dim)))

    in_features = hidden_dim * seq_len
    cls_bound = 1.0 / (in_features ** 0.5)
    cls_w = jax.random.uniform(next(keys), (1, in_features), jnp.float32,
                               -cls_bound, cls_bound)
    cls_b = jax.random.uniform(next(keys), (1,), jnp.float32,
                               -cls_bound, cls_bound)

    return {
        "embedding": embedding,
        "w_ih0_t": jnp.transpose(w_ih0),            # (E, 4H)
        "w_hh0_t": jnp.transpose(w_hh0),            # (H, 4H)
        "b0": b0.reshape(1, 4 * hidden_dim),
        "deep_layers": tuple(deep_layers),
        # classifier weight as (T, H): row t multiplies h_t (feature t*H + j)
        "cls_w_th": cls_w.reshape(seq_len, hidden_dim),
        "cls_b": cls_b.reshape(1, 1),
    }


# ----------------------------- plain-JAX reference ---------------------------
def _reference_forward(token_ids, params):
    emb = jnp.take(params["embedding"], token_ids, axis=0)          # (B, T, E)
    B, T, _ = emb.shape
    H = params["w_hh0_t"].shape[0]

    layer_params = [(params["w_ih0_t"], params["w_hh0_t"], params["b0"])]
    for (w_cat, b_l) in params["deep_layers"]:
        layer_params.append((w_cat[:H, :], w_cat[H:, :], b_l))

    def cell(x_t, h, c, w_ih_t, w_hh_t, b):
        g = x_t @ w_ih_t + h @ w_hh_t + b
        i = jax.nn.sigmoid(g[:, 0 * H:1 * H])
        f = jax.nn.sigmoid(g[:, 1 * H:2 * H])
        gg = jnp.tanh(g[:, 2 * H:3 * H])
        o = jax.nn.sigmoid(g[:, 3 * H:4 * H])
        c = f * c + i * gg
        return o * jnp.tanh(c), c

    x = emb
    for (w_ih_t, w_hh_t, b) in layer_params:
        h = jnp.zeros((B, H), jnp.float32)
        c = jnp.zeros((B, H), jnp.float32)
        outs = []
        for t in range(T):
            h, c = cell(x[:, t, :], h, c, w_ih_t, w_hh_t, b)
            outs.append(h)
        x = jnp.stack(outs, axis=1)                                 # (B, T, H)

    flat = x.reshape(B, T * H)
    logit = flat @ params["cls_w_th"].reshape(T * H, 1) + params["cls_b"]
    return jax.nn.sigmoid(logit)


if __name__ == "__main__":
    VOCAB, EMB_DIM, HIDDEN, LAYERS, SEQ_LEN, BATCH = 50, 32, 32, 2, 8, 2

    key = jax.random.PRNGKey(0)
    k_params, k_tokens = jax.random.split(key)

    params = init_params(k_params, VOCAB, EMB_DIM, HIDDEN, LAYERS, SEQ_LEN)
    token_ids = jax.random.randint(k_tokens, (BATCH, SEQ_LEN), 0, VOCAB,
                                   dtype=jnp.int32)

    out = lstm_net_forward(token_ids, params)
    out = jax.block_until_ready(out)

    assert out.shape == (BATCH, 1), out.shape
    assert bool(jnp.all((out >= 0.0) & (out <= 1.0)))

    ref = _reference_forward(token_ids, params)
    assert bool(jnp.allclose(out, ref, rtol=1e-4, atol=1e-5)), (out, ref)

    print("KERNEL_OK")
</pallas_src>

<mosaic_0001>
module attributes {stable_mosaic.version = 11 : i64} {
  func.func @kernel(%arg0: memref<16x32xf32, #tpu.memory_space<vmem>>, %arg1: memref<32x128xf32, #tpu.memory_space<vmem>>, %arg2: memref<32x128xf32, #tpu.memory_space<vmem>>, %arg3: memref<1x128xf32, #tpu.memory_space<vmem>>, %arg4: memref<64x128xf32, #tpu.memory_space<vmem>>, %arg5: memref<1x128xf32, #tpu.memory_space<vmem>>, %arg6: memref<8x32xf32, #tpu.memory_space<vmem>>, %arg7: memref<1x1xf32, #tpu.memory_space<vmem>>, %arg8: memref<2x128xf32, #tpu.memory_space<vmem>>) attributes {dimension_semantics = [], scalar_prefetch = 0 : i64, scratch_operands = 0 : i64, tpu.core_type = #tpu.core_type<tc>} {
    %c0 = arith.constant 0 : index
    %c0_0 = arith.constant 0 : index
    %0 = vector.load %arg0[%c0, %c0_0] : memref<16x32xf32, #tpu.memory_space<vmem>>, vector<16x32xf32>
    %c0_1 = arith.constant 0 : index
    %c0_2 = arith.constant 0 : index
    %1 = vector.load %arg1[%c0_1, %c0_2] : memref<32x128xf32, #tpu.memory_space<vmem>>, vector<32x128xf32>
    %cst = arith.constant dense<0.000000e+00> : vector<16x128xf32>
    %2 = tpu.matmul %0, %1, %cst {dimension_numbers = #tpu.dot_dimension_numbers<[1], [0], [0], [1], [0, 0, 1, 1], [], []>} : vector<16x32xf32>, vector<32x128xf32>, vector<16x128xf32> -> vector<16x128xf32>
    %c0_3 = arith.constant 0 : index
    %c0_4 = arith.constant 0 : index
    %3 = vector.load %arg3[%c0_3, %c0_4] : memref<1x128xf32, #tpu.memory_space<vmem>>, vector<1x128xf32>
    %4 = vector.broadcast %3 : vector<1x128xf32> to vector<16x128xf32>
    %5 = arith.addf %2, %4 : vector<16x128xf32>
    %c0_5 = arith.constant 0 : index
    %c0_6 = arith.constant 0 : index
    %6 = vector.load %arg2[%c0_5, %c0_6] : memref<32x128xf32, #tpu.memory_space<vmem>>, vector<32x128xf32>
    %c0_7 = arith.constant 0 : index
    %c0_8 = arith.constant 0 : index
    %7 = vector.load %arg4[%c0_7, %c0_8] : memref<64x128xf32, #tpu.memory_space<vmem>>, vector<64x128xf32>
    %c0_9 = arith.constant 0 : index
    %c0_10 = arith.constant 0 : index
    %8 = vector.load %arg5[%c0_9, %c0_10] : memref<1x128xf32, #tpu.memory_space<vmem>>, vector<1x128xf32>
    %c0_11 = arith.constant 0 : index
    %c0_12 = arith.constant 0 : index
    %9 = vector.load %arg6[%c0_11, %c0_12] : memref<8x32xf32, #tpu.memory_space<vmem>>, vector<8x32xf32>
    %cst_13 = arith.constant 0.000000e+00 : f32
    %10 = vector.broadcast %cst_13 : f32 to vector<2x32xf32>
    %11 = vector.extract_strided_slice %5 {offsets = [0, 0], sizes = [2, 128], strides = [1, 1]} : vector<16x128xf32> to vector<2x128xf32>
    %cst_14 = arith.constant dense<0.000000e+00> : vector<2x128xf32>
    %12 = tpu.matmul %10, %6, %cst_14 {dimension_numbers = #tpu.dot_dimension_numbers<[1], [0], [0], [1], [0, 0, 1, 1], [], []>} : vector<2x32xf32>, vector<32x128xf32>, vector<2x128xf32> -> vector<2x128xf32>
    %13 = arith.addf %11, %12 : vector<2x128xf32>
    %14 = vector.extract_strided_slice %13 {offsets = [0, 0], sizes = [2, 32], strides = [1, 1]} : vector<2x128xf32> to vector<2x32xf32>
    %15 = arith.negf %14 : vector<2x32xf32>
    %16 = math.exp %15 : vector<2x32xf32>
    %cst_15 = arith.constant 1.000000e+00 : f32
    %17 = vector.broadcast %cst_15 : f32 to vector<2x32xf32>
    %18 = arith.addf %17, %16 : vector<2x32xf32>
    %19 = arith.divf %17, %18 : vector<2x32xf32>
    %20 = vector.extract_strided_slice %13 {offsets = [0, 32], sizes = [2, 32], strides = [1, 1]} : vector<2x128xf32> to vector<2x32xf32>
    %21 = arith.negf %20 : vector<2x32xf32>
    %22 = math.exp %21 : vector<2x32xf32>
    %cst_16 = arith.constant 1.000000e+00 : f32
    %23 = vector.broadcast %cst_16 : f32 to vector<2x32xf32>
    %24 = arith.addf %23, %22 : vector<2x32xf32>
    %25 = arith.divf %23, %24 : vector<2x32xf32>
    %26 = vector.extract_strided_slice %13 {offsets = [0, 64], sizes = [2, 32], strides = [1, 1]} : vector<2x128xf32> to vector<2x32xf32>
    %27 = math.tanh %26 : vector<2x32xf32>
    %28 = vector.extract_strided_slice %13 {offsets = [0, 96], sizes = [2, 32], strides = [1, 1]} : vector<2x128xf32> to vector<2x32xf32>
    %29 = arith.negf %28 : vector<2x32xf32>
    %30 = math.exp %29 : vector<2x32xf32>
    %cst_17 = arith.constant 1.000000e+00 : f32
    %31 = vector.broadcast %cst_17 : f32 to vector<2x32xf32>
    %32 = arith.addf %31, %30 : vector<2x32xf32>
    %33 = arith.divf %31, %32 : vector<2x32xf32>
    %34 = arith.mulf %25, %10 : vector<2x32xf32>
    %35 = arith.mulf %19, %27 : vector<2x32xf32>
    %36 = arith.addf %34, %35 : vector<2x32xf32>
    %37 = math.tanh %36 : vector<2x32xf32>
    %38 = arith.mulf %33, %37 : vector<2x32xf32>
    %39 = tpu.concatenate %38, %10 in 1 : vector<2x32xf32>, vector<2x32xf32> -> vector<2x64xf32>
    %cst_18 = arith.constant dense<0.000000e+00> : vector<2x128xf32>
    %40 = tpu.matmul %39, %7, %cst_18 {dimension_numbers = #tpu.dot_dimension_numbers<[1], [0], [0], [1], [0, 0, 1, 1], [], []>} : vector<2x64xf32>, vector<64x128xf32>, vector<2x128xf32> -> vector<2x128xf32>
    %41 = vector.broadcast %8 : vector<1x128xf32> to vector<2x128xf32>
    %42 = arith.addf %40, %41 : vector<2x128xf32>
    %43 = vector.extract_strided_slice %42 {offsets = [0, 0], sizes = [2, 32], strides = [1, 1]} : vector<2x128xf32> to vector<2x32xf32>
    %44 = arith.negf %43 : vector<2x32xf32>
    %45 = math.exp %44 : vector<2x32xf32>
    %cst_19 = arith.constant 1.000000e+00 : f32
    %46 = vector.broadcast %cst_19 : f32 to vector<2x32xf32>
    %47 = arith.addf %46, %45 : vector<2x32xf32>
    %48 = arith.divf %46, %47 : vector<2x32xf32>
    %49 = vector.extract_strided_slice %42 {offsets = [0, 32], sizes = [2, 32], strides = [1, 1]} : vector<2x128xf32> to vector<2x32xf32>
    %50 = arith.negf %49 : vector<2x32xf32>
    %51 = math.exp %50 : vector<2x32xf32>
    %cst_20 = arith.constant 1.000000e+00 : f32
    %52 = vector.broadcast %cst_20 : f32 to vector<2x32xf32>
    %53 = arith.addf %52, %51 : vector<2x32xf32>
    %54 = arith.divf %52, %53 : vector<2x32xf32>
    %55 = vector.extract_strided_slice %42 {offsets = [0, 64], sizes = [2, 32], strides = [1, 1]} : vector<2x128xf32> to vector<2x32xf32>
    %56 = math.tanh %55 : vector<2x32xf32>
    %57 = vector.extract_strided_slice %42 {offsets = [0, 96], sizes = [2, 32], strides = [1, 1]} : vector<2x128xf32> to vector<2x32xf32>
    %58 = arith.negf %57 : vector<2x32xf32>
    %59 = math.exp %58 : vector<2x32xf32>
    %cst_21 = arith.constant 1.000000e+00 : f32
    %60 = vector.broadcast %cst_21 : f32 to vector<2x32xf32>
    %61 = arith.addf %60, %59 : vector<2x32xf32>
    %62 = arith.divf %60, %61 : vector<2x32xf32>
    %63 = arith.mulf %54, %10 : vector<2x32xf32>
    %64 = arith.mulf %48, %56 : vector<2x32xf32>
    %65 = arith.addf %63, %64 : vector<2x32xf32>
    %66 = math.tanh %65 : vector<2x32xf32>
    %67 = arith.mulf %62, %66 : vector<2x32xf32>
    %68 = vector.extract_strided_slice %9 {offsets = [0, 0], sizes = [1, 32], strides = [1, 1]} : vector<8x32xf32> to vector<1x32xf32>
    %69 = vector.broadcast %68 : vector<1x32xf32> to vector<2x32xf32>
    %70 = arith.mulf %67, %69 : vector<2x32xf32>
    %71 = arith.addf %10, %70 : vector<2x32xf32>
    %72 = vector.extract_strided_slice %5 {offsets = [2, 0], sizes = [2, 128], strides = [1, 1]} : vector<16x128xf32> to vector<2x128xf32>
    %cst_22 = arith.constant dense<0.000000e+00> : vector<2x128xf32>
    %73 = tpu.matmul %38, %6, %cst_22 {dimension_numbers = #tpu.dot_dimension_numbers<[1], [0], [0], [1], [0, 0, 1, 1], [], []>} : vector<2x32xf32>, vector<32x128xf32>, vector<2x128xf32> -> vector<2x128xf32>
    %74 = arith.addf %72, %73 : vector<2x128xf32>
    %75 = vector.extract_strided_slice %74 {offsets = [0, 0], sizes = [2, 32], strides = [1, 1]} : vector<2x128xf32> to vector<2x32xf32>
    %76 = arith.negf %75 : vector<2x32xf32>
    %77 = math.exp %76 : vector<2x32xf32>
    %cst_23 = arith.constant 1.000000e+00 : f32
    %78 = vector.broadcast %cst_23 : f32 to vector<2x32xf32>
    %79 = arith.addf %78, %77 : vector<2x32xf32>
    %80 = arith.divf %78, %79 : vector<2x32xf32>
    %81 = vector.extract_strided_slice %74 {offsets = [0, 32], sizes = [2, 32], strides = [1, 1]} : vector<2x128xf32> to vector<2x32xf32>
    %82 = arith.negf %81 : vector<2x32xf32>
    %83 = math.exp %82 : vector<2x32xf32>
    %cst_24 = arith.constant 1.000000e+00 : f32
    %84 = vector.broadcast %cst_24 : f32 to vector<2x32xf32>
    %85 = arith.addf %84, %83 : vector<2x32xf32>
    %86 = arith.divf %84, %85 : vector<2x32xf32>
    %87 = vector.extract_strided_slice %74 {offsets = [0, 64], sizes = [2, 32], strides = [1, 1]} : vector<2x128xf32> to vector<2x32xf32>
    %88 = math.tanh %87 : vector<2x32xf32>
    %89 = vector.extract_strided_slice %74 {offsets = [0, 96], sizes = [2, 32], strides = [1, 1]} : vector<2x128xf32> to vector<2x32xf32>
    %90 = arith.negf %89 : vector<2x32xf32>
    %91 = math.exp %90 : vector<2x32xf32>
    %cst_25 = arith.constant 1.000000e+00 : f32
    %92 = vector.broadcast %cst_25 : f32 to vector<2x32xf32>
    %93 = arith.addf %92, %91 : vector<2x32xf32>
    %94 = arith.divf %92, %93 : vector<2x32xf32>
    %95 = arith.mulf %86, %36 : vector<2x32xf32>
    %96 = arith.mulf %80, %88 : vector<2x32xf32>
    %97 = arith.addf %95, %96 : vector<2x32xf32>
    %98 = math.tanh %97 : vector<2x32xf32>
    %99 = arith.mulf %94, %98 : vector<2x32xf32>
    %100 = tpu.concatenate %99, %67 in 1 : vector<2x32xf32>, vector<2x32xf32> -> vector<2x64xf32>
    %cst_26 = arith.constant dense<0.000000e+00> : vector<2x128xf32>
    %101 = tpu.matmul %100, %7, %cst_26 {dimension_numbers = #tpu.dot_dimension_numbers<[1], [0], [0], [1], [0, 0, 1, 1], [], []>} : vector<2x64xf32>, vector<64x128xf32>, vector<2x128xf32> -> vector<2x128xf32>
    %102 = vector.broadcast %8 : vector<1x128xf32> to vector<2x128xf32>
    %103 = arith.addf %101, %102 : vector<2x128xf32>
    %104 = vector.extract_strided_slice %103 {offsets = [0, 0], sizes = [2, 32], strides = [1, 1]} : vector<2x128xf32> to vector<2x32xf32>
    %105 = arith.negf %104 : vector<2x32xf32>
    %106 = math.exp %105 : vector<2x32xf32>
    %cst_27 = arith.constant 1.000000e+00 : f32
    %107 = vector.broadcast %cst_27 : f32 to vector<2x32xf32>
    %108 = arith.addf %107, %106 : vector<2x32xf32>
    %109 = arith.divf %107, %108 : vector<2x32xf32>
    %110 = vector.extract_strided_slice %103 {offsets = [0, 32], sizes = [2, 32], strides = [1, 1]} : vector<2x128xf32> to vector<2x32xf32>
    %111 = arith.negf %110 : vector<2x32xf32>
    %112 = math.exp %111 : vector<2x32xf32>
    %cst_28 = arith.constant 1.000000e+00 : f32
    %113 = vector.broadcast %cst_28 : f32 to vector<2x32xf32>
    %114 = arith.addf %113, %112 : vector<2x32xf32>
    %115 = arith.divf %113, %114 : vector<2x32xf32>
    %116 = vector.extract_strided_slice %103 {offsets = [0, 64], sizes = [2, 32], strides = [1, 1]} : vector<2x128xf32> to vector<2x32xf32>
    %117 = math.tanh %116 : vector<2x32xf32>
    %118 = vector.extract_strided_slice %103 {offsets = [0, 96], sizes = [2, 32], strides = [1, 1]} : vector<2x128xf32> to vector<2x32xf32>
    %119 = arith.negf %118 : vector<2x32xf32>
    %120 = math.exp %119 : vector<2x32xf32>
    %cst_29 = arith.constant 1.000000e+00 : f32
    %121 = vector.broadcast %cst_29 : f32 to vector<2x32xf32>
    %122 = arith.addf %121, %120 : vector<2x32xf32>
    %123 = arith.divf %121, %122 : vector<2x32xf32>
    %124 = arith.mulf %115, %65 : vector<2x32xf32>
    %125 = arith.mulf %109, %117 : vector<2x32xf32>
    %126 = arith.addf %124, %125 : vector<2x32xf32>
    %127 = math.tanh %126 : vector<2x32xf32>
    %128 = arith.mulf %123, %127 : vector<2x32xf32>
    %129 = vector.extract_strided_slice %9 {offsets = [1, 0], sizes = [1, 32], strides = [1, 1]} : vector<8x32xf32> to vector<1x32xf32>
    %130 = vector.broadcast %129 : vector<1x32xf32> to vector<2x32xf32>
    %131 = arith.mulf %128, %130 : vector<2x32xf32>
    %132 = arith.addf %71, %131 : vector<2x32xf32>
    %133 = vector.extract_strided_slice %5 {offsets = [4, 0], sizes = [2, 128], strides = [1, 1]} : vector<16x128xf32> to vector<2x128xf32>
    %cst_30 = arith.constant dense<0.000000e+00> : vector<2x128xf32>
    %134 = tpu.matmul %99, %6, %cst_30 {dimension_numbers = #tpu.dot_dimension_numbers<[1], [0], [0], [1], [0, 0, 1, 1], [], []>} : vector<2x32xf32>, vector<32x128xf32>, vector<2x128xf32> -> vector<2x128xf32>
    %135 = arith.addf %133, %134 : vector<2x128xf32>
    %136 = vector.extract_strided_slice %135 {offsets = [0, 0], sizes = [2, 32], strides = [1, 1]} : vector<2x128xf32> to vector<2x32xf32>
    %137 = arith.negf %136 : vector<2x32xf32>
    %138 = math.exp %137 : vector<2x32xf32>
    %cst_31 = arith.constant 1.000000e+00 : f32
    %139 = vector.broadcast %cst_31 : f32 to vector<2x32xf32>
    %140 = arith.addf %139, %138 : vector<2x32xf32>
    %141 = arith.divf %139, %140 : vector<2x32xf32>
    %142 = vector.extract_strided_slice %135 {offsets = [0, 32], sizes = [2, 32], strides = [1, 1]} : vector<2x128xf32> to vector<2x32xf32>
    %143 = arith.negf %142 : vector<2x32xf32>
    %144 = math.exp %143 : vector<2x32xf32>
    %cst_32 = arith.constant 1.000000e+00 : f32
    %145 = vector.broadcast %cst_32 : f32 to vector<2x32xf32>
    %146 = arith.addf %145, %144 : vector<2x32xf32>
    %147 = arith.divf %145, %146 : vector<2x32xf32>
    %148 = vector.extract_strided_slice %135 {offsets = [0, 64], sizes = [2, 32], strides = [1, 1]} : vector<2x128xf32> to vector<2x32xf32>
    %149 = math.tanh %148 : vector<2x32xf32>
    %150 = vector.extract_strided_slice %135 {offsets = [0, 96], sizes = [2, 32], strides = [1, 1]} : vector<2x128xf32> to vector<2x32xf32>
    %151 = arith.negf %150 : vector<2x32xf32>
    %152 = math.exp %151 : vector<2x32xf32>
    %cst_33 = arith.constant 1.000000e+00 : f32
    %153 = vector.broadcast %cst_33 : f32 to vector<2x32xf32>
    %154 = arith.addf %153, %152 : vector<2x32xf32>
    %155 = arith.divf %153, %154 : vector<2x32xf32>
    %156 = arith.mulf %147, %97 : vector<2x32xf32>
    %157 = arith.mulf %141, %149 : vector<2x32xf32>
    %158 = arith.addf %156, %157 : vector<2x32xf32>
    %159 = math.tanh %158 : vector<2x32xf32>
    %160 = arith.mulf %155, %159 : vector<2x32xf32>
    %161 = tpu.concatenate %160, %128 in 1 : vector<2x32xf32>, vector<2x32xf32> -> vector<2x64xf32>
    %cst_34 = arith.constant dense<0.000000e+00> : vector<2x128xf32>
    %162 = tpu.matmul %161, %7, %cst_34 {dimension_numbers = #tpu.dot_dimension_numbers<[1], [0], [0], [1], [0, 0, 1, 1], [], []>} : vector<2x64xf32>, vector<64x128xf32>, vector<2x128xf32> -> vector<2x128xf32>
    %163 = vector.broadcast %8 : vector<1x128xf32> to vector<2x128xf32>
    %164 = arith.addf %162, %163 : vector<2x128xf32>
    %165 = vector.extract_strided_slice %164 {offsets = [0, 0], sizes = [2, 32], strides = [1, 1]} : vector<2x128xf32> to vector<2x32xf32>
    %166 = arith.negf %165 : vector<2x32xf32>
    %167 = math.exp %166 : vector<2x32xf32>
    %cst_35 = arith.constant 1.000000e+00 : f32
    %168 = vector.broadcast %cst_35 : f32 to vector<2x32xf32>
    %169 = arith.addf %168, %167 : vector<2x32xf32>
    %170 = arith.divf %168, %169 : vector<2x32xf32>
    %171 = vector.extract_strided_slice %164 {offsets = [0, 32], sizes = [2, 32], strides = [1, 1]} : vector<2x128xf32> to vector<2x32xf32>
    %172 = arith.negf %171 : vector<2x32xf32>
    %173 = math.exp %172 : vector<2x32xf32>
    %cst_36 = arith.constant 1.000000e+00 : f32
    %174 = vector.broadcast %cst_36 : f32 to vector<2x32xf32>
    %175 = arith.addf %174, %173 : vector<2x32xf32>
    %176 = arith.divf %174, %175 : vector<2x32xf32>
    %177 = vector.extract_strided_slice %164 {offsets = [0, 64], sizes = [2, 32], strides = [1, 1]} : vector<2x128xf32> to vector<2x32xf32>
    %178 = math.tanh %177 : vector<2x32xf32>
    %179 = vector.extract_strided_slice %164 {offsets = [0, 96], sizes = [2, 32], strides = [1, 1]} : vector<2x128xf32> to vector<2x32xf32>
    %180 = arith.negf %179 : vector<2x32xf32>
    %181 = math.exp %180 : vector<2x32xf32>
    %cst_37 = arith.constant 1.000000e+00 : f32
    %182 = vector.broadcast %cst_37 : f32 to vector<2x32xf32>
    %183 = arith.addf %182, %181 : vector<2x32xf32>
    %184 = arith.divf %182, %183 : vector<2x32xf32>
    %185 = arith.mulf %176, %126 : vector<2x32xf32>
    %186 = arith.mulf %170, %178 : vector<2x32xf32>
    %187 = arith.addf %185, %186 : vector<2x32xf32>
    %188 = math.tanh %187 : vector<2x32xf32>
    %189 = arith.mulf %184, %188 : vector<2x32xf32>
    %190 = vector.extract_strided_slice %9 {offsets = [2, 0], sizes = [1, 32], strides = [1, 1]} : vector<8x32xf32> to vector<1x32xf32>
    %191 = vector.broadcast %190 : vector<1x32xf32> to vector<2x32xf32>
    %192 = arith.mulf %189, %191 : vector<2x32xf32>
    %193 = arith.addf %132, %192 : vector<2x32xf32>
    %194 = vector.extract_strided_slice %5 {offsets = [6, 0], sizes = [2, 128], strides = [1, 1]} : vector<16x128xf32> to vector<2x128xf32>
    %cst_38 = arith.constant dense<0.000000e+00> : vector<2x128xf32>
    %195 = tpu.matmul %160, %6, %cst_38 {dimension_numbers = #tpu.dot_dimension_numbers<[1], [0], [0], [1], [0, 0, 1, 1], [], []>} : vector<2x32xf32>, vector<32x128xf32>, vector<2x128xf32> -> vector<2x128xf32>
    %196 = arith.addf %194, %195 : vector<2x128xf32>
    %197 = vector.extract_strided_slice %196 {offsets = [0, 0], sizes = [2, 32], strides = [1, 1]} : vector<2x128xf32> to vector<2x32xf32>
    %198 = arith.negf %197 : vector<2x32xf32>
    %199 = math.exp %198 : vector<2x32xf32>
    %cst_39 = arith.constant 1.000000e+00 : f32
    %200 = vector.broadcast %cst_39 : f32 to vector<2x32xf32>
    %201 = arith.addf %200, %199 : vector<2x32xf32>
    %202 = arith.divf %200, %201 : vector<2x32xf32>
    %203 = vector.extract_strided_slice %196 {offsets = [0, 32], sizes = [2, 32], strides = [1, 1]} : vector<2x128xf32> to vector<2x32xf32>
    %204 = arith.negf %203 : vector<2x32xf32>
    %205 = math.exp %204 : vector<2x32xf32>
    %cst_40 = arith.constant 1.000000e+00 : f32
    %206 = vector.broadcast %cst_40 : f32 to vector<2x32xf32>
    %207 = arith.addf %206, %205 : vector<2x32xf32>
    %208 = arith.divf %206, %207 : vector<2x32xf32>
    %209 = vector.extract_strided_slice %196 {offsets = [0, 64], sizes = [2, 32], strides = [1, 1]} : vector<2x128xf32> to vector<2x32xf32>
    %210 = math.tanh %209 : vector<2x32xf32>
    %211 = vector.extract_strided_slice %196 {offsets = [0, 96], sizes = [2, 32], strides = [1, 1]} : vector<2x128xf32> to vector<2x32xf32>
    %212 = arith.negf %211 : vector<2x32xf32>
    %213 = math.exp %212 : vector<2x32xf32>
    %cst_41 = arith.constant 1.000000e+00 : f32
    %214 = vector.broadcast %cst_41 : f32 to vector<2x32xf32>
    %215 = arith.addf %214, %213 : vector<2x32xf32>
    %216 = arith.divf %214, %215 : vector<2x32xf32>
    %217 = arith.mulf %208, %158 : vector<2x32xf32>
    %218 = arith.mulf %202, %210 : vector<2x32xf32>
    %219 = arith.addf %217, %218 : vector<2x32xf32>
    %220 = math.tanh %219 : vector<2x32xf32>
    %221 = arith.mulf %216, %220 : vector<2x32xf32>
    %222 = tpu.concatenate %221, %189 in 1 : vector<2x32xf32>, vector<2x32xf32> -> vector<2x64xf32>
    %cst_42 = arith.constant dense<0.000000e+00> : vector<2x128xf32>
    %223 = tpu.matmul %222, %7, %cst_42 {dimension_numbers = #tpu.dot_dimension_numbers<[1], [0], [0], [1], [0, 0, 1, 1], [], []>} : vector<2x64xf32>, vector<64x128xf32>, vector<2x128xf32> -> vector<2x128xf32>
    %224 = vector.broadcast %8 : vector<1x128xf32> to vector<2x128xf32>
    %225 = arith.addf %223, %224 : vector<2x128xf32>
    %226 = vector.extract_strided_slice %225 {offsets = [0, 0], sizes = [2, 32], strides = [1, 1]} : vector<2x128xf32> to vector<2x32xf32>
    %227 = arith.negf %226 : vector<2x32xf32>
    %228 = math.exp %227 : vector<2x32xf32>
    %cst_43 = arith.constant 1.000000e+00 : f32
    %229 = vector.broadcast %cst_43 : f32 to vector<2x32xf32>
    %230 = arith.addf %229, %228 : vector<2x32xf32>
    %231 = arith.divf %229, %230 : vector<2x32xf32>
    %232 = vector.extract_strided_slice %225 {offsets = [0, 32], sizes = [2, 32], strides = [1, 1]} : vector<2x128xf32> to vector<2x32xf32>
    %233 = arith.negf %232 : vector<2x32xf32>
    %234 = math.exp %233 : vector<2x32xf32>
    %cst_44 = arith.constant 1.000000e+00 : f32
    %235 = vector.broadcast %cst_44 : f32 to vector<2x32xf32>
    %236 = arith.addf %235, %234 : vector<2x32xf32>
    %237 = arith.divf %235, %236 : vector<2x32xf32>
    %238 = vector.extract_strided_slice %225 {offsets = [0, 64], sizes = [2, 32], strides = [1, 1]} : vector<2x128xf32> to vector<2x32xf32>
    %239 = math.tanh %238 : vector<2x32xf32>
    %240 = vector.extract_strided_slice %225 {offsets = [0, 96], sizes = [2, 32], strides = [1, 1]} : vector<2x128xf32> to vector<2x32xf32>
    %241 = arith.negf %240 : vector<2x32xf32>
    %242 = math.exp %241 : vector<2x32xf32>
    %cst_45 = arith.constant 1.000000e+00 : f32
    %243 = vector.broadcast %cst_45 : f32 to vector<2x32xf32>
    %244 = arith.addf %243, %242 : vector<2x32xf32>
    %245 = arith.divf %243, %244 : vector<2x32xf32>
    %246 = arith.mulf %237, %187 : vector<2x32xf32>
    %247 = arith.mulf %231, %239 : vector<2x32xf32>
    %248 = arith.addf %246, %247 : vector<2x32xf32>
    %249 = math.tanh %248 : vector<2x32xf32>
    %250 = arith.mulf %245, %249 : vector<2x32xf32>
    %251 = vector.extract_strided_slice %9 {offsets = [3, 0], sizes = [1, 32], strides = [1, 1]} : vector<8x32xf32> to vector<1x32xf32>
    %252 = vector.broadcast %251 : vector<1x32xf32> to vector<2x32xf32>
    %253 = arith.mulf %250, %252 : vector<2x32xf32>
    %254 = arith.addf %193, %253 : vector<2x32xf32>
    %255 = vector.extract_strided_slice %5 {offsets = [8, 0], sizes = [2, 128], strides = [1, 1]} : vector<16x128xf32> to vector<2x128xf32>
    %cst_46 = arith.constant dense<0.000000e+00> : vector<2x128xf32>
    %256 = tpu.matmul %221, %6, %cst_46 {dimension_numbers = #tpu.dot_dimension_numbers<[1], [0], [0], [1], [0, 0, 1, 1], [], []>} : vector<2x32xf32>, vector<32x128xf32>, vector<2x128xf32> -> vector<2x128xf32>
    %257 = arith.addf %255, %256 : vector<2x128xf32>
    %258 = vector.extract_strided_slice %257 {offsets = [0, 0], sizes = [2, 32], strides = [1, 1]} : vector<2x128xf32> to vector<2x32xf32>
    %259 = arith.negf %258 : vector<2x32xf32>
    %260 = math.exp %259 : vector<2x32xf32>
    %cst_47 = arith.constant 1.000000e+00 : f32
    %261 = vector.broadcast %cst_47 : f32 to vector<2x32xf32>
    %262 = arith.addf %261, %260 : vector<2x32xf32>
    %263 = arith.divf %261, %262 : vector<2x32xf32>
    %264 = vector.extract_strided_slice %257 {offsets = [0, 32], sizes = [2, 32], strides = [1, 1]} : vector<2x128xf32> to vector<2x32xf32>
    %265 = arith.negf %264 : vector<2x32xf32>
    %266 = math.exp %265 : vector<2x32xf32>
    %cst_48 = arith.constant 1.000000e+00 : f32
    %267 = vector.broadcast %cst_48 : f32 to vector<2x32xf32>
    %268 = arith.addf %267, %266 : vector<2x32xf32>
    %269 = arith.divf %267, %268 : vector<2x32xf32>
    %270 = vector.extract_strided_slice %257 {offsets = [0, 64], sizes = [2, 32], strides = [1, 1]} : vector<2x128xf32> to vector<2x32xf32>
    %271 = math.tanh %270 : vector<2x32xf32>
    %272 = vector.extract_strided_slice %257 {offsets = [0, 96], sizes = [2, 32], strides = [1, 1]} : vector<2x128xf32> to vector<2x32xf32>
    %273 = arith.negf %272 : vector<2x32xf32>
    %274 = math.exp %273 : vector<2x32xf32>
    %cst_49 = arith.constant 1.000000e+00 : f32
    %275 = vector.broadcast %cst_49 : f32 to vector<2x32xf32>
    %276 = arith.addf %275, %274 : vector<2x32xf32>
    %277 = arith.divf %275, %276 : vector<2x32xf32>
    %278 = arith.mulf %269, %219 : vector<2x32xf32>
    %279 = arith.mulf %263, %271 : vector<2x32xf32>
    %280 = arith.addf %278, %279 : vector<2x32xf32>
    %281 = math.tanh %280 : vector<2x32xf32>
    %282 = arith.mulf %277, %281 : vector<2x32xf32>
    %283 = tpu.concatenate %282, %250 in 1 : vector<2x32xf32>, vector<2x32xf32> -> vector<2x64xf32>
    %cst_50 = arith.constant dense<0.000000e+00> : vector<2x128xf32>
    %284 = tpu.matmul %283, %7, %cst_50 {dimension_numbers = #tpu.dot_dimension_numbers<[1], [0], [0], [1], [0, 0, 1, 1], [], []>} : vector<2x64xf32>, vector<64x128xf32>, vector<2x128xf32> -> vector<2x128xf32>
    %285 = vector.broadcast %8 : vector<1x128xf32> to vector<2x128xf32>
    %286 = arith.addf %284, %285 : vector<2x128xf32>
    %287 = vector.extract_strided_slice %286 {offsets = [0, 0], sizes = [2, 32], strides = [1, 1]} : vector<2x128xf32> to vector<2x32xf32>
    %288 = arith.negf %287 : vector<2x32xf32>
    %289 = math.exp %288 : vector<2x32xf32>
    %cst_51 = arith.constant 1.000000e+00 : f32
    %290 = vector.broadcast %cst_51 : f32 to vector<2x32xf32>
    %291 = arith.addf %290, %289 : vector<2x32xf32>
    %292 = arith.divf %290, %291 : vector<2x32xf32>
    %293 = vector.extract_strided_slice %286 {offsets = [0, 32], sizes = [2, 32], strides = [1, 1]} : vector<2x128xf32> to vector<2x32xf32>
    %294 = arith.negf %293 : vector<2x32xf32>
    %295 = math.exp %294 : vector<2x32xf32>
    %cst_52 = arith.constant 1.000000e+00 : f32
    %296 = vector.broadcast %cst_52 : f32 to vector<2x32xf32>
    %297 = arith.addf %296, %295 : vector<2x32xf32>
    %298 = arith.divf %296, %297 : vector<2x32xf32>
    %299 = vector.extract_strided_slice %286 {offsets = [0, 64], sizes = [2, 32], strides = [1, 1]} : vector<2x128xf32> to vector<2x32xf32>
    %300 = math.tanh %299 : vector<2x32xf32>
    %301 = vector.extract_strided_slice %286 {offsets = [0, 96], sizes = [2, 32], strides = [1, 1]} : vector<2x128xf32> to vector<2x32xf32>
    %302 = arith.negf %301 : vector<2x32xf32>
    %303 = math.exp %302 : vector<2x32xf32>
    %cst_53 = arith.constant 1.000000e+00 : f32
    %304 = vector.broadcast %cst_53 : f32 to vector<2x32xf32>
    %305 = arith.addf %304, %303 : vector<2x32xf32>
    %306 = arith.divf %304, %305 : vector<2x32xf32>
    %307 = arith.mulf %298, %248 : vector<2x32xf32>
    %308 = arith.mulf %292, %300 : vector<2x32xf32>
    %309 = arith.addf %307, %308 : vector<2x32xf32>
    %310 = math.tanh %309 : vector<2x32xf32>
    %311 = arith.mulf %306, %310 : vector<2x32xf32>
    %312 = vector.extract_strided_slice %9 {offsets = [4, 0], sizes = [1, 32], strides = [1, 1]} : vector<8x32xf32> to vector<1x32xf32>
    %313 = vector.broadcast %312 : vector<1x32xf32> to vector<2x32xf32>
    %314 = arith.mulf %311, %313 : vector<2x32xf32>
    %315 = arith.addf %254, %314 : vector<2x32xf32>
    %316 = vector.extract_strided_slice %5 {offsets = [10, 0], sizes = [2, 128], strides = [1, 1]} : vector<16x128xf32> to vector<2x128xf32>
    %cst_54 = arith.constant dense<0.000000e+00> : vector<2x128xf32>
    %317 = tpu.matmul %282, %6, %cst_54 {dimension_numbers = #tpu.dot_dimension_numbers<[1], [0], [0], [1], [0, 0, 1, 1], [], []>} : vector<2x32xf32>, vector<32x128xf32>, vector<2x128xf32> -> vector<2x128xf32>
    %318 = arith.addf %316, %317 : vector<2x128xf32>
    %319 = vector.extract_strided_slice %318 {offsets = [0, 0], sizes = [2, 32], strides = [1, 1]} : vector<2x128xf32> to vector<2x32xf32>
    %320 = arith.negf %319 : vector<2x32xf32>
    %321 = math.exp %320 : vector<2x32xf32>
    %cst_55 = arith.constant 1.000000e+00 : f32
    %322 = vector.broadcast %cst_55 : f32 to vector<2x32xf32>
    %323 = arith.addf %322, %321 : vector<2x32xf32>
    %324 = arith.divf %322, %323 : vector<2x32xf32>
    %325 = vector.extract_strided_slice %318 {offsets = [0, 32], sizes = [2, 32], strides = [1, 1]} : vector<2x128xf32> to vector<2x32xf32>
    %326 = arith.negf %325 : vector<2x32xf32>
    %327 = math.exp %326 : vector<2x32xf32>
    %cst_56 = arith.constant 1.000000e+00 : f32
    %328 = vector.broadcast %cst_56 : f32 to vector<2x32xf32>
    %329 = arith.addf %328, %327 : vector<2x32xf32>
    %330 = arith.divf %328, %329 : vector<2x32xf32>
    %331 = vector.extract_strided_slice %318 {offsets = [0, 64], sizes = [2, 32], strides = [1, 1]} : vector<2x128xf32> to vector<2x32xf32>
    %332 = math.tanh %331 : vector<2x32xf32>
    %333 = vector.extract_strided_slice %318 {offsets = [0, 96], sizes = [2, 32], strides = [1, 1]} : vector<2x128xf32> to vector<2x32xf32>
    %334 = arith.negf %333 : vector<2x32xf32>
    %335 = math.exp %334 : vector<2x32xf32>
    %cst_57 = arith.constant 1.000000e+00 : f32
    %336 = vector.broadcast %cst_57 : f32 to vector<2x32xf32>
    %337 = arith.addf %336, %335 : vector<2x32xf32>
    %338 = arith.divf %336, %337 : vector<2x32xf32>
    %339 = arith.mulf %330, %280 : vector<2x32xf32>
    %340 = arith.mulf %324, %332 : vector<2x32xf32>
    %341 = arith.addf %339, %340 : vector<2x32xf32>
    %342 = math.tanh %341 : vector<2x32xf32>
    %343 = arith.mulf %338, %342 : vector<2x32xf32>
    %344 = tpu.concatenate %343, %311 in 1 : vector<2x32xf32>, vector<2x32xf32> -> vector<2x64xf32>
    %cst_58 = arith.constant dense<0.000000e+00> : vector<2x128xf32>
    %345 = tpu.matmul %344, %7, %cst_58 {dimension_numbers = #tpu.dot_dimension_numbers<[1], [0], [0], [1], [0, 0, 1, 1], [], []>} : vector<2x64xf32>, vector<64x128xf32>, vector<2x128xf32> -> vector<2x128xf32>
    %346 = vector.broadcast %8 : vector<1x128xf32> to vector<2x128xf32>
    %347 = arith.addf %345, %346 : vector<2x128xf32>
    %348 = vector.extract_strided_slice %347 {offsets = [0, 0], sizes = [2, 32], strides = [1, 1]} : vector<2x128xf32> to vector<2x32xf32>
    %349 = arith.negf %348 : vector<2x32xf32>
    %350 = math.exp %349 : vector<2x32xf32>
    %cst_59 = arith.constant 1.000000e+00 : f32
    %351 = vector.broadcast %cst_59 : f32 to vector<2x32xf32>
    %352 = arith.addf %351, %350 : vector<2x32xf32>
    %353 = arith.divf %351, %352 : vector<2x32xf32>
    %354 = vector.extract_strided_slice %347 {offsets = [0, 32], sizes = [2, 32], strides = [1, 1]} : vector<2x128xf32> to vector<2x32xf32>
    %355 = arith.negf %354 : vector<2x32xf32>
    %356 = math.exp %355 : vector<2x32xf32>
    %cst_60 = arith.constant 1.000000e+00 : f32
    %357 = vector.broadcast %cst_60 : f32 to vector<2x32xf32>
    %358 = arith.addf %357, %356 : vector<2x32xf32>
    %359 = arith.divf %357, %358 : vector<2x32xf32>
    %360 = vector.extract_strided_slice %347 {offsets = [0, 64], sizes = [2, 32], strides = [1, 1]} : vector<2x128xf32> to vector<2x32xf32>
    %361 = math.tanh %360 : vector<2x32xf32>
    %362 = vector.extract_strided_slice %347 {offsets = [0, 96], sizes = [2, 32], strides = [1, 1]} : vector<2x128xf32> to vector<2x32xf32>
    %363 = arith.negf %362 : vector<2x32xf32>
    %364 = math.exp %363 : vector<2x32xf32>
    %cst_61 = arith.constant 1.000000e+00 : f32
    %365 = vector.broadcast %cst_61 : f32 to vector<2x32xf32>
    %366 = arith.addf %365, %364 : vector<2x32xf32>
    %367 = arith.divf %365, %366 : vector<2x32xf32>
    %368 = arith.mulf %359, %309 : vector<2x32xf32>
    %369 = arith.mulf %353, %361 : vector<2x32xf32>
    %370 = arith.addf %368, %369 : vector<2x32xf32>
    %371 = math.tanh %370 : vector<2x32xf32>
    %372 = arith.mulf %367, %371 : vector<2x32xf32>
    %373 = vector.extract_strided_slice %9 {offsets = [5, 0], sizes = [1, 32], strides = [1, 1]} : vector<8x32xf32> to vector<1x32xf32>
    %374 = vector.broadcast %373 : vector<1x32xf32> to vector<2x32xf32>
    %375 = arith.mulf %372, %374 : vector<2x32xf32>
    %376 = arith.addf %315, %375 : vector<2x32xf32>
    %377 = vector.extract_strided_slice %5 {offsets = [12, 0], sizes = [2, 128], strides = [1, 1]} : vector<16x128xf32> to vector<2x128xf32>
    %cst_62 = arith.constant dense<0.000000e+00> : vector<2x128xf32>
    %378 = tpu.matmul %343, %6, %cst_62 {dimension_numbers = #tpu.dot_dimension_numbers<[1], [0], [0], [1], [0, 0, 1, 1], [], []>} : vector<2x32xf32>, vector<32x128xf32>, vector<2x128xf32> -> vector<2x128xf32>
    %379 = arith.addf %377, %378 : vector<2x128xf32>
    %380 = vector.extract_strided_slice %379 {offsets = [0, 0], sizes = [2, 32], strides = [1, 1]} : vector<2x128xf32> to vector<2x32xf32>
    %381 = arith.negf %380 : vector<2x32xf32>
    %382 = math.exp %381 : vector<2x32xf32>
    %cst_63 = arith.constant 1.000000e+00 : f32
    %383 = vector.broadcast %cst_63 : f32 to vector<2x32xf32>
    %384 = arith.addf %383, %382 : vector<2x32xf32>
    %385 = arith.divf %383, %384 : vector<2x32xf32>
    %386 = vector.extract_strided_slice %379 {offsets = [0, 32], sizes = [2, 32], strides = [1, 1]} : vector<2x128xf32> to vector<2x32xf32>
    %387 = arith.negf %386 : vector<2x32xf32>
    %388 = math.exp %387 : vector<2x32xf32>
    %cst_64 = arith.constant 1.000000e+00 : f32
    %389 = vector.broadcast %cst_64 : f32 to vector<2x32xf32>
    %390 = arith.addf %389, %388 : vector<2x32xf32>
    %391 = arith.divf %389, %390 : vector<2x32xf32>
    %392 = vector.extract_strided_slice %379 {offsets = [0, 64], sizes = [2, 32], strides = [1, 1]} : vector<2x128xf32> to vector<2x32xf32>
    %393 = math.tanh %392 : vector<2x32xf32>
    %394 = vector.extract_strided_slice %379 {offsets = [0, 96], sizes = [2, 32], strides = [1, 1]} : vector<2x128xf32> to vector<2x32xf32>
    %395 = arith.negf %394 : vector<2x32xf32>
    %396 = math.exp %395 : vector<2x32xf32>
    %cst_65 = arith.constant 1.000000e+00 : f32
    %397 = vector.broadcast %cst_65 : f32 to vector<2x32xf32>
    %398 = arith.addf %397, %396 : vector<2x32xf32>
    %399 = arith.divf %397, %398 : vector<2x32xf32>
    %400 = arith.mulf %391, %341 : vector<2x32xf32>
    %401 = arith.mulf %385, %393 : vector<2x32xf32>
    %402 = arith.addf %400, %401 : vector<2x32xf32>
    %403 = math.tanh %402 : vector<2x32xf32>
    %404 = arith.mulf %399, %403 : vector<2x32xf32>
    %405 = tpu.concatenate %404, %372 in 1 : vector<2x32xf32>, vector<2x32xf32> -> vector<2x64xf32>
    %cst_66 = arith.constant dense<0.000000e+00> : vector<2x128xf32>
    %406 = tpu.matmul %405, %7, %cst_66 {dimension_numbers = #tpu.dot_dimension_numbers<[1], [0], [0], [1], [0, 0, 1, 1], [], []>} : vector<2x64xf32>, vector<64x128xf32>, vector<2x128xf32> -> vector<2x128xf32>
    %407 = vector.broadcast %8 : vector<1x128xf32> to vector<2x128xf32>
    %408 = arith.addf %406, %407 : vector<2x128xf32>
    %409 = vector.extract_strided_slice %408 {offsets = [0, 0], sizes = [2, 32], strides = [1, 1]} : vector<2x128xf32> to vector<2x32xf32>
    %410 = arith.negf %409 : vector<2x32xf32>
    %411 = math.exp %410 : vector<2x32xf32>
    %cst_67 = arith.constant 1.000000e+00 : f32
    %412 = vector.broadcast %cst_67 : f32 to vector<2x32xf32>
    %413 = arith.addf %412, %411 : vector<2x32xf32>
    %414 = arith.divf %412, %413 : vector<2x32xf32>
    %415 = vector.extract_strided_slice %408 {offsets = [0, 32], sizes = [2, 32], strides = [1, 1]} : vector<2x128xf32> to vector<2x32xf32>
    %416 = arith.negf %415 : vector<2x32xf32>
    %417 = math.exp %416 : vector<2x32xf32>
    %cst_68 = arith.constant 1.000000e+00 : f32
    %418 = vector.broadcast %cst_68 : f32 to vector<2x32xf32>
    %419 = arith.addf %418, %417 : vector<2x32xf32>
    %420 = arith.divf %418, %419 : vector<2x32xf32>
    %421 = vector.extract_strided_slice %408 {offsets = [0, 64], sizes = [2, 32], strides = [1, 1]} : vector<2x128xf32> to vector<2x32xf32>
    %422 = math.tanh %421 : vector<2x32xf32>
    %423 = vector.extract_strided_slice %408 {offsets = [0, 96], sizes = [2, 32], strides = [1, 1]} : vector<2x128xf32> to vector<2x32xf32>
    %424 = arith.negf %423 : vector<2x32xf32>
    %425 = math.exp %424 : vector<2x32xf32>
    %cst_69 = arith.constant 1.000000e+00 : f32
    %426 = vector.broadcast %cst_69 : f32 to vector<2x32xf32>
    %427 = arith.addf %426, %425 : vector<2x32xf32>
    %428 = arith.divf %426, %427 : vector<2x32xf32>
    %429 = arith.mulf %420, %370 : vector<2x32xf32>
    %430 = arith.mulf %414, %422 : vector<2x32xf32>
    %431 = arith.addf %429, %430 : vector<2x32xf32>
    %432 = math.tanh %431 : vector<2x32xf32>
    %433 = arith.mulf %428, %432 : vector<2x32xf32>
    %434 = vector.extract_strided_slice %9 {offsets = [6, 0], sizes = [1, 32], strides = [1, 1]} : vector<8x32xf32> to vector<1x32xf32>
    %435 = vector.broadcast %434 : vector<1x32xf32> to vector<2x32xf32>
    %436 = arith.mulf %433, %435 : vector<2x32xf32>
    %437 = arith.addf %376, %436 : vector<2x32xf32>
    %438 = vector.extract_strided_slice %5 {offsets = [14, 0], sizes = [2, 128], strides = [1, 1]} : vector<16x128xf32> to vector<2x128xf32>
    %cst_70 = arith.constant dense<0.000000e+00> : vector<2x128xf32>
    %439 = tpu.matmul %404, %6, %cst_70 {dimension_numbers = #tpu.dot_dimension_numbers<[1], [0], [0], [1], [0, 0, 1, 1], [], []>} : vector<2x32xf32>, vector<32x128xf32>, vector<2x128xf32> -> vector<2x128xf32>
    %440 = arith.addf %438, %439 : vector<2x128xf32>
    %441 = vector.extract_strided_slice %440 {offsets = [0, 0], sizes = [2, 32], strides = [1, 1]} : vector<2x128xf32> to vector<2x32xf32>
    %442 = arith.negf %441 : vector<2x32xf32>
    %443 = math.exp %442 : vector<2x32xf32>
    %cst_71 = arith.constant 1.000000e+00 : f32
    %444 = vector.broadcast %cst_71 : f32 to vector<2x32xf32>
    %445 = arith.addf %444, %443 : vector<2x32xf32>
    %446 = arith.divf %444, %445 : vector<2x32xf32>
    %447 = vector.extract_strided_slice %440 {offsets = [0, 32], sizes = [2, 32], strides = [1, 1]} : vector<2x128xf32> to vector<2x32xf32>
    %448 = arith.negf %447 : vector<2x32xf32>
    %449 = math.exp %448 : vector<2x32xf32>
    %cst_72 = arith.constant 1.000000e+00 : f32
    %450 = vector.broadcast %cst_72 : f32 to vector<2x32xf32>
    %451 = arith.addf %450, %449 : vector<2x32xf32>
    %452 = arith.divf %450, %451 : vector<2x32xf32>
    %453 = vector.extract_strided_slice %440 {offsets = [0, 64], sizes = [2, 32], strides = [1, 1]} : vector<2x128xf32> to vector<2x32xf32>
    %454 = math.tanh %453 : vector<2x32xf32>
    %455 = vector.extract_strided_slice %440 {offsets = [0, 96], sizes = [2, 32], strides = [1, 1]} : vector<2x128xf32> to vector<2x32xf32>
    %456 = arith.negf %455 : vector<2x32xf32>
    %457 = math.exp %456 : vector<2x32xf32>
    %cst_73 = arith.constant 1.000000e+00 : f32
    %458 = vector.broadcast %cst_73 : f32 to vector<2x32xf32>
    %459 = arith.addf %458, %457 : vector<2x32xf32>
    %460 = arith.divf %458, %459 : vector<2x32xf32>
    %461 = arith.mulf %452, %402 : vector<2x32xf32>
    %462 = arith.mulf %446, %454 : vector<2x32xf32>
    %463 = arith.addf %461, %462 : vector<2x32xf32>
    %464 = math.tanh %463 : vector<2x32xf32>
    %465 = arith.mulf %460, %464 : vector<2x32xf32>
    %466 = tpu.concatenate %465, %433 in 1 : vector<2x32xf32>, vector<2x32xf32> -> vector<2x64xf32>
    %cst_74 = arith.constant dense<0.000000e+00> : vector<2x128xf32>
    %467 = tpu.matmul %466, %7, %cst_74 {dimension_numbers = #tpu.dot_dimension_numbers<[1], [0], [0], [1], [0, 0, 1, 1], [], []>} : vector<2x64xf32>, vector<64x128xf32>, vector<2x128xf32> -> vector<2x128xf32>
    %468 = vector.broadcast %8 : vector<1x128xf32> to vector<2x128xf32>
    %469 = arith.addf %467, %468 : vector<2x128xf32>
    %470 = vector.extract_strided_slice %469 {offsets = [0, 0], sizes = [2, 32], strides = [1, 1]} : vector<2x128xf32> to vector<2x32xf32>
    %471 = arith.negf %470 : vector<2x32xf32>
    %472 = math.exp %471 : vector<2x32xf32>
    %cst_75 = arith.constant 1.000000e+00 : f32
    %473 = vector.broadcast %cst_75 : f32 to vector<2x32xf32>
    %474 = arith.addf %473, %472 : vector<2x32xf32>
    %475 = arith.divf %473, %474 : vector<2x32xf32>
    %476 = vector.extract_strided_slice %469 {offsets = [0, 32], sizes = [2, 32], strides = [1, 1]} : vector<2x128xf32> to vector<2x32xf32>
    %477 = arith.negf %476 : vector<2x32xf32>
    %478 = math.exp %477 : vector<2x32xf32>
    %cst_76 = arith.constant 1.000000e+00 : f32
    %479 = vector.broadcast %cst_76 : f32 to vector<2x32xf32>
    %480 = arith.addf %479, %478 : vector<2x32xf32>
    %481 = arith.divf %479, %480 : vector<2x32xf32>
    %482 = vector.extract_strided_slice %469 {offsets = [0, 64], sizes = [2, 32], strides = [1, 1]} : vector<2x128xf32> to vector<2x32xf32>
    %483 = math.tanh %482 : vector<2x32xf32>
    %484 = vector.extract_strided_slice %469 {offsets = [0, 96], sizes = [2, 32], strides = [1, 1]} : vector<2x128xf32> to vector<2x32xf32>
    %485 = arith.negf %484 : vector<2x32xf32>
    %486 = math.exp %485 : vector<2x32xf32>
    %cst_77 = arith.constant 1.000000e+00 : f32
    %487 = vector.broadcast %cst_77 : f32 to vector<2x32xf32>
    %488 = arith.addf %487, %486 : vector<2x32xf32>
    %489 = arith.divf %487, %488 : vector<2x32xf32>
    %490 = arith.mulf %481, %431 : vector<2x32xf32>
    %491 = arith.mulf %475, %483 : vector<2x32xf32>
    %492 = arith.addf %490, %491 : vector<2x32xf32>
    %493 = math.tanh %492 : vector<2x32xf32>
    %494 = arith.mulf %489, %493 : vector<2x32xf32>
    %495 = vector.extract_strided_slice %9 {offsets = [7, 0], sizes = [1, 32], strides = [1, 1]} : vector<8x32xf32> to vector<1x32xf32>
    %496 = vector.broadcast %495 : vector<1x32xf32> to vector<2x32xf32>
    %497 = arith.mulf %494, %496 : vector<2x32xf32>
    %498 = arith.addf %437, %497 : vector<2x32xf32>
    %cst_78 = arith.constant dense<0.000000e+00> : vector<2xf32>
    %499 = vector.multi_reduction <add>, %498, %cst_78 [1] : vector<2x32xf32> to vector<2xf32>
    %500 = vector.shape_cast %499 : vector<2xf32> to vector<2x1xf32>
    %c0_79 = arith.constant 0 : index
    %c0_80 = arith.constant 0 : index
    %501 = vector.load %arg7[%c0_79, %c0_80] : memref<1x1xf32, #tpu.memory_space<vmem>>, vector<1x1xf32>
    %502 = vector.broadcast %501 : vector<1x1xf32> to vector<2x1xf32>
    %503 = arith.addf %500, %502 : vector<2x1xf32>
    %504 = arith.negf %503 : vector<2x1xf32>
    %505 = math.exp %504 : vector<2x1xf32>
    %cst_81 = arith.constant 1.000000e+00 : f32
    %506 = vector.broadcast %cst_81 : f32 to vector<2x1xf32>
    %507 = arith.addf %506, %505 : vector<2x1xf32>
    %508 = arith.divf %506, %507 : vector<2x1xf32>
    %509 = vector.shape_cast %508 : vector<2x1xf32> to vector<2x1xf32>
    %510 = vector.broadcast %509 : vector<2x1xf32> to vector<2x128xf32>
    %c0_82 = arith.constant 0 : index
    %c0_83 = arith.constant 0 : index
    %511 = vector.load %arg8[%c0_82, %c0_83] : memref<2x128xf32, #tpu.memory_space<vmem>>, vector<2x128xf32>
    tpu.vector_store %arg8[%c0_82, %c0_83], %510 {strides = array<i32>} : memref<2x128xf32, #tpu.memory_space<vmem>>, vector<2x128xf32>,
    return
  }
}

</mosaic_0001>

<llo_original>
// kernel: lstm_net_forward.1
$region0: #{lstm_net_forward.1}
  #allocation0 [shape = 'u32[]', space=smem, size = 0x4, offset = 0x4, fixed_abs, tag = 'smem constant byte address 0x4 - core index']
  #allocation1 [shape = 'u32[144,128]{1,0:T(1,128)}', space=vmem, size = 0x12000, scoped, tag = 'internal scratch']
  #allocation2 [shape = 'f32[1,1]{1,0:T(1,128)S(1)}', space=vmem, size = 0x200, scoped, tag = 'scoped memory for lstm_net_forward.1']
  %s0 = inlined_call_operand.vmem [shape: f32[16,32], index: 0, kind: input, shape index: {}]
  %s1 = inlined_call_operand.vmem [shape: f32[32,128], index: 1, kind: input, shape index: {}]
  %s2 = inlined_call_operand.vmem [shape: f32[32,128], index: 2, kind: input, shape index: {}]
  %s3 = inlined_call_operand.vmem [shape: f32[1,128], index: 3, kind: input, shape index: {}]
  %s4 = inlined_call_operand.vmem [shape: f32[64,128], index: 4, kind: input, shape index: {}]
  %s5 = inlined_call_operand.vmem [shape: f32[1,128], index: 5, kind: input, shape index: {}]
  %s6 = inlined_call_operand.vmem [shape: f32[8,32], index: 6, kind: input, shape index: {}]
  %s7 = inlined_call_operand.<no memory space> [shape: f32[1,1], index: 7, kind: input, shape index: {}]
  %s8 = inlined_call_operand.vmem [shape: f32[2,128], index: 8, kind: output, shape index: {}]
  %s9 = sld [smem:[#allocation0]]
  $region42: #{lstm_net_forward.1} parent=0
    _
  %s11 = ssub.s32 1, %s9
  %s12 = scalar_select 0, %s11, %s9
  %v13 = vstv %s7
  %14 = vst [vmem:[#allocation2] sm:$0x1] %v13
  // Predicated region
  $region2: #{lstm_net_forward.1} parent=0 // pred_check
    _
  $region3: #{lstm_net_forward.1} parent=0 // pred_check_branch
    %16 = sbr.rel (0) target = $region5
  $region4: #{lstm_net_forward.1} parent=0 // pred_region
    _
  $region5: #{lstm_net_forward.1} parent=0 // pred_fallthru
    _
  // Predicated region
  $region6: #{lstm_net_forward.1} parent=0 // pred_check
    _
  $region7: #{lstm_net_forward.1} parent=0 // pred_check_branch
    %18 = sbr.rel (0) target = $region9
  $region8: #{lstm_net_forward.1} parent=0 // pred_region
    _
  $region9: #{lstm_net_forward.1} parent=0 // pred_fallthru
    _
  // Predicated region
  $region10: #{lstm_net_forward.1} parent=0 // pred_check
    _
  $region11: #{lstm_net_forward.1} parent=0 // pred_check_branch
    %20 = sbr.rel (0) target = $region13
  $region12: #{lstm_net_forward.1} parent=0 // pred_region
    _
  $region13: #{lstm_net_forward.1} parent=0 // pred_fallthru
    _
  // Predicated region
  $region14: #{lstm_net_forward.1} parent=0 // pred_check
    _
  $region15: #{lstm_net_forward.1} parent=0 // pred_check_branch
    %22 = sbr.rel (0) target = $region17
  $region16: #{lstm_net_forward.1} parent=0 // pred_region
    _
  $region17: #{lstm_net_forward.1} parent=0 // pred_fallthru
    _
  // Predicated region
  $region18: #{lstm_net_forward.1} parent=0 // pred_check
    _
  $region19: #{lstm_net_forward.1} parent=0 // pred_check_branch
    %24 = sbr.rel (0) target = $region21
  $region20: #{lstm_net_forward.1} parent=0 // pred_region
    _
  $region21: #{lstm_net_forward.1} parent=0 // pred_fallthru
    _
  // Predicated region
  $region22: #{lstm_net_forward.1} parent=0 // pred_check
    _
  $region23: #{lstm_net_forward.1} parent=0 // pred_check_branch
    %26 = sbr.rel (0) target = $region25
  $region24: #{lstm_net_forward.1} parent=0 // pred_region
    _
  $region25: #{lstm_net_forward.1} parent=0 // pred_fallthru
    _
  // Predicated region
  $region26: #{lstm_net_forward.1} parent=0 // pred_check
    _
  $region27: #{lstm_net_forward.1} parent=0 // pred_check_branch
    %28 = sbr.rel (0) target = $region29
  $region28: #{lstm_net_forward.1} parent=0 // pred_region
    _
  $region29: #{lstm_net_forward.1} parent=0 // pred_fallthru
    _
  // Predicated region
  $region30: #{lstm_net_forward.1} parent=0 // pred_check
    _
  $region31: #{lstm_net_forward.1} parent=0 // pred_check_branch
    %30 = sbr.rel (0) target = $region33
  $region32: #{lstm_net_forward.1} parent=0 // pred_region
    _
  $region33: #{lstm_net_forward.1} parent=0 // pred_fallthru
    _
  %v31 = vld [vmem:[%s0] sm:$0xff]
  %v32 = vld [vmem:[%s0 + $0x8] sm:$0xff]
  %v33 = vld [vmem:[%s1] sm:$0xff]
  %v34 = vld [vmem:[%s1 + $0x8] sm:$0xff]
  %v35 = vld [vmem:[%s1 + $0x10] sm:$0xff]
  %v36 = vld [vmem:[%s1 + $0x18] sm:$0xff]
  %v37 = vld [vmem:[%s3] sm:$0x1]
  %v39 = vlaneseq
  %v40 = vshrl.u32 %v39, 7
  %v41 = vsub.s32 0, %v40
  %v42 = vrot.slane %v37, %v41
  %vm44 = vcmask 261120
  %v46 = vsel %vm44, %v31, 0
  %v49 = vsel %vm44, %v32, 0
  %51 = vmatprep.subr.mxu0 0.0
  %52 = vmatpush1.msra.mxu0 %v33
  %53 = vmatprep.subr.mxu0 0.0
  %54 = vmatpush1.msra.mxu0 %v34
  %55 = vmatprep.subr.mxu0 0.0
  %56 = vmatpush1.msra.mxu0 %v35
  %57 = vmatprep.subr.mxu0 0.0
  %58 = vmatpush1.msra.mxu0 %v36
  %59 = vmatprep.subr.mxu0 0.0
  %60 = vmatpush1.msra.mxu0 0.0
  %61 = vmatprep.subr.mxu0 0.0
  %62 = vmatpush1.msra.mxu0 0.0
  %63 = vmatprep.subr.mxu0 0.0
  %64 = vmatpush1.msra.mxu0 0.0
  %65 = vmatprep.subr.mxu0 0.0
  %66 = vmatpush1.msra.mxu0 0.0
  %67 = vmatprep.subr.mxu0 0.0
  %68 = vmatpush1.msra.mxu0 0.0
  %69 = vmatprep.subr.mxu0 0.0
  %70 = vmatpush1.msra.mxu0 0.0
  %71 = vmatprep.subr.mxu0 0.0
  %72 = vmatpush1.msra.mxu0 0.0
  %73 = vmatprep.subr.mxu0 0.0
  %74 = vmatpush1.msra.mxu0 0.0
  %75 = vmatprep.subr.mxu0 0.0
  %76 = vmatpush1.msra.mxu0 0.0
  %77 = vmatprep.subr.mxu0 0.0
  %78 = vmatpush1.msra.mxu0 0.0
  %79 = vmatprep.subr.mxu0 0.0
  %80 = vmatpush1.msra.mxu0 0.0
  %81 = vmatprep.subr.mxu0 0.0
  %82 = vmatpush1.msra.mxu0 0.0
  %83 = vmatprep.subr.mxu0 0.0
  %84 = vmatpush1.msra.mxu0 0.0
  %85 = vmatprep.subr.mxu0 0.0
  %86 = vmatpush1.msra.mxu0 0.0
  %87 = vmatprep.subr.mxu0 0.0
  %88 = vmatpush1.msra.mxu0 0.0
  %89 = vmatprep.subr.mxu0 0.0
  %90 = vmatpush1.msra.mxu0 0.0
  %91 = vmatprep.subr.mxu0 0.0
  %92 = vmatpush1.msra.mxu0 0.0
  %93 = vmatprep.subr.mxu0 0.0
  %94 = vmatpush1.msra.mxu0 0.0
  %95 = vmatprep.subr.mxu0 0.0
  %96 = vmatpush1.msra.mxu0 0.0
  %97 = vmatprep.subr.mxu0 0.0
  %98 = vmatpush1.msra.mxu0 0.0
  %99 = vmatprep.subr.mxu0 0.0
  %100 = vmatpush1.msra.mxu0 0.0
  %101 = vmatprep.subr.mxu0 0.0
  %102 = vmatpush1.msra.mxu0 0.0
  %103 = vmatprep.subr.mxu0 0.0
  %104 = vmatpush1.msra.mxu0 0.0
  %105 = vmatprep.subr.mxu0 0.0
  %106 = vmatpush1.msra.mxu0 0.0
  %107 = vmatprep.subr.mxu0 0.0
  %108 = vmatpush1.msra.mxu0 0.0
  %109 = vmatprep.subr.mxu0 0.0
  %110 = vmatpush1.msra.mxu0 0.0
  %111 = vmatprep.subr.mxu0 0.0
  %112 = vmatpush1.msra.mxu0 0.0
  %113 = vmatprep.subr.mxu0 0.0
  %114 = vmatpush1.msra.mxu0 0.0
  %115 = vmatprep.mubr.f32.mxu0 0.0
  %116 = vmatmul.mubr.f32.gmra.mrb[0].mxu0 %v46
  %v117 = vpop.f32.mrb[0].mxu0
  %v118 = vadd.f32 %v42, %v117
  %v119 = vpop.f32.mrb[0].mxu0
  %120 = vmatprep.mubr.f32.mxu0 0.0
  %121 = vmatmul.mubr.f32.gmra.mrb[0].mxu0 %v49
  %v122 = vpop.f32.mrb[0].mxu0
  %v123 = vadd.f32 %v42, %v122
  %v124 = vpop.f32.mrb[0].mxu0
  %125 = vdwg.mxu0
  %v126 = vld [vmem:[%s2] sm:$0xff]
  %v127 = vld [vmem:[%s2 + $0x8] sm:$0xff]
  %v128 = vld [vmem:[%s2 + $0x10] sm:$0xff]
  %v129 = vld [vmem:[%s2 + $0x18] sm:$0xff]
  %v130 = vld [vmem:[%s4] sm:$0xff]
  %v131 = vld [vmem:[%s4 + $0x8] sm:$0xff]
  %v132 = vld [vmem:[%s4 + $0x10] sm:$0xff]
  %v133 = vld [vmem:[%s4 + $0x18] sm:$0xff]
  %v134 = vld [vmem:[%s4 + $0x20] sm:$0xff]
  %v135 = vld [vmem:[%s4 + $0x28] sm:$0xff]
  %v136 = vld [vmem:[%s4 + $0x30] sm:$0xff]
  %v137 = vld [vmem:[%s4 + $0x38] sm:$0xff]
  %v138 = vld [vmem:[%s5] sm:$0x1]
  %v139 = vld [vmem:[%s6] sm:$0xff]
  %v141 = vsel %vm44, 0.0, 0
  %143 = vmatprep.subr.mxu0 0.0
  %144 = vmatpush1.msra.mxu0 %v126
  %145 = vmatprep.subr.mxu0 0.0
  %146 = vmatpush1.msra.mxu0 %v127
  %147 = vmatprep.subr.mxu0 0.0
  %148 = vmatpush1.msra.mxu0 %v128
  %149 = vmatprep.subr.mxu0 0.0
  %150 = vmatpush1.msra.mxu0 %v129
  %151 = vmatprep.subr.mxu0 0.0
  %152 = vmatpush1.msra.mxu0 0.0
  %153 = vmatprep.subr.mxu0 0.0
  %154 = vmatpush1.msra.mxu0 0.0
  %155 = vmatprep.subr.mxu0 0.0
  %156 = vmatpush1.msra.mxu0 0.0
  %157 = vmatprep.subr.mxu0 0.0
  %158 = vmatpush1.msra.mxu0 0.0
  %159 = vmatprep.subr.mxu0 0.0
  %160 = vmatpush1.msra.mxu0 0.0
  %161 = vmatprep.subr.mxu0 0.0
  %162 = vmatpush1.msra.mxu0 0.0
  %163 = vmatprep.subr.mxu0 0.0
  %164 = vmatpush1.msra.mxu0 0.0
  %165 = vmatprep.subr.mxu0 0.0
  %166 = vmatpush1.msra.mxu0 0.0
  %167 = vmatprep.subr.mxu0 0.0
  %168 = vmatpush1.msra.mxu0 0.0
  %169 = vmatprep.subr.mxu0 0.0
  %170 = vmatpush1.msra.mxu0 0.0
  %171 = vmatprep.subr.mxu0 0.0
  %172 = vmatpush1.msra.mxu0 0.0
  %173 = vmatprep.subr.mxu0 0.0
  %174 = vmatpush1.msra.mxu0 0.0
  %175 = vmatprep.subr.mxu0 0.0
  %176 = vmatpush1.msra.mxu0 0.0
  %177 = vmatprep.subr.mxu0 0.0
  %178 = vmatpush1.msra.mxu0 0.0
  %179 = vmatprep.subr.mxu0 0.0
  %180 = vmatpush1.msra.mxu0 0.0
  %181 = vmatprep.subr.mxu0 0.0
  %182 = vmatpush1.msra.mxu0 0.0
  %183 = vmatprep.subr.mxu0 0.0
  %184 = vmatpush1.msra.mxu0 0.0
  %185 = vmatprep.subr.mxu0 0.0
  %186 = vmatpush1.msra.mxu0 0.0
  %187 = vmatprep.subr.mxu0 0.0
  %188 = vmatpush1.msra.mxu0 0.0
  %189 = vmatprep.subr.mxu0 0.0
  %190 = vmatpush1.msra.mxu0 0.0
  %191 = vmatprep.subr.mxu0 0.0
  %192 = vmatpush1.msra.mxu0 0.0
  %193 = vmatprep.subr.mxu0 0.0
  %194 = vmatpush1.msra.mxu0 0.0
  %195 = vmatprep.subr.mxu0 0.0
  %196 = vmatpush1.msra.mxu0 0.0
  %197 = vmatprep.subr.mxu0 0.0
  %198 = vmatpush1.msra.mxu0 0.0
  %199 = vmatprep.subr.mxu0 0.0
  %200 = vmatpush1.msra.mxu0 0.0
  %201 = vmatprep.subr.mxu0 0.0
  %202 = vmatpush1.msra.mxu0 0.0
  %203 = vmatprep.subr.mxu0 0.0
  %204 = vmatpush1.msra.mxu0 0.0
  %205 = vmatprep.subr.mxu0 0.0
  %206 = vmatpush1.msra.mxu0 0.0
  %207 = vmatprep.mubr.f32.mxu0 0.0
  %208 = vmatmul.mubr.f32.gmra.mrb[0].mxu0 %v141
  %v209 = vpop.f32.mrb[0].mxu0
  %v210 = vadd.f32 0.0, %v209
  %v211 = vpop.f32.mrb[0].mxu0
  %212 = vdwg.mxu0
  %v213 = vadd.f32 %v118, %v210
  %v214 = vxor.u32 %v213, 2147483648
  %v215 = vmul.f32 %v214, 1.442695
  %v216 = vpow.pop %v215
  %v217 = vadd.f32 %v216, 1.0
  %v218 = vrcp.pop %v217
  %v219 = vmul.f32 1.0, %v218
  %v220 = vtanh.pop %v213
  %v221 = vmul.f32 %v219, 0.0
  %223 = vrot.lane.b32.xlu0 %v220, 64
  %v224 = vpop.permute.xlu0 %223
  %v226 = vmul.f32 %v219, %v224
  %228 = vrot.lane.b32.xlu0 %v226, 32
  %v229 = vpop.permute.xlu0 %228
  %v231 = vadd.f32 %v221, %v229
  %v232 = vtanh.pop %v231
  %234 = vrot.lane.b32.xlu0 %v232, 64
  %v235 = vpop.permute.xlu0 %234
  %v237 = vmul.f32 %v219, %v235
  %239 = vrot.lane.b32.xlu0 %v237, 32
  %v240 = vpop.permute.xlu0 %239
  %v242 = vsel %vm44, %v240, 0.0
  %v244 = vlaneseq
  %v245 = vshrl.u32 %v244, 7
  %v246 = vsub.s32 0, %v245
  %v247 = vrot.slane %v138, %v246
  %vm249 = vcmask 523264
  %v251 = vsel %vm249, %v242, 0
  %253 = vmatprep.subr.mxu0 0.0
  %254 = vmatpush1.msra.mxu0 %v130
  %255 = vmatprep.subr.mxu0 0.0
  %256 = vmatpush1.msra.mxu0 %v131
  %257 = vmatprep.subr.mxu0 0.0
  %258 = vmatpush1.msra.mxu0 %v132
  %259 = vmatprep.subr.mxu0 0.0
  %260 = vmatpush1.msra.mxu0 %v133
  %261 = vmatprep.subr.mxu0 0.0
  %262 = vmatpush1.msra.mxu0 %v134
  %263 = vmatprep.subr.mxu0 0.0
  %264 = vmatpush1.msra.mxu0 %v135
  %265 = vmatprep.subr.mxu0 0.0
  %266 = vmatpush1.msra.mxu0 %v136
  %267 = vmatprep.subr.mxu0 0.0
  %268 = vmatpush1.msra.mxu0 %v137
  %269 = vmatprep.subr.mxu0 0.0
  %270 = vmatpush1.msra.mxu0 0.0
  %271 = vmatprep.subr.mxu0 0.0
  %272 = vmatpush1.msra.mxu0 0.0
  %273 = vmatprep.subr.mxu0 0.0
  %274 = vmatpush1.msra.mxu0 0.0
  %275 = vmatprep.subr.mxu0 0.0
  %276 = vmatpush1.msra.mxu0 0.0
  %277 = vmatprep.subr.mxu0 0.0
  %278 = vmatpush1.msra.mxu0 0.0
  %279 = vmatprep.subr.mxu0 0.0
  %280 = vmatpush1.msra.mxu0 0.0
  %281 = vmatprep.subr.mxu0 0.0
  %282 = vmatpush1.msra.mxu0 0.0
  %283 = vmatprep.subr.mxu0 0.0
  %284 = vmatpush1.msra.mxu0 0.0
  %285 = vmatprep.subr.mxu0 0.0
  %286 = vmatpush1.msra.mxu0 0.0
  %287 = vmatprep.subr.mxu0 0.0
  %288 = vmatpush1.msra.mxu0 0.0
  %289 = vmatprep.subr.mxu0 0.0
  %290 = vmatpush1.msra.mxu0 0.0
  %291 = vmatprep.subr.mxu0 0.0
  %292 = vmatpush1.msra.mxu0 0.0
  %293 = vmatprep.subr.mxu0 0.0
  %294 = vmatpush1.msra.mxu0 0.0
  %295 = vmatprep.subr.mxu0 0.0
  %296 = vmatpush1.msra.mxu0 0.0
  %297 = vmatprep.subr.mxu0 0.0
  %298 = vmatpush1.msra.mxu0 0.0
  %299 = vmatprep.subr.mxu0 0.0
  %300 = vmatpush1.msra.mxu0 0.0
  %301 = vmatprep.subr.mxu0 0.0
  %302 = vmatpush1.msra.mxu0 0.0
  %303 = vmatprep.subr.mxu0 0.0
  %304 = vmatpush1.msra.mxu0 0.0
  %305 = vmatprep.subr.mxu0 0.0
  %306 = vmatpush1.msra.mxu0 0.0
  %307 = vmatprep.subr.mxu0 0.0
  %308 = vmatpush1.msra.mxu0 0.0
  %309 = vmatprep.subr.mxu0 0.0
  %310 = vmatpush1.msra.mxu0 0.0
  %311 = vmatprep.subr.mxu0 0.0
  %312 = vmatpush1.msra.mxu0 0.0
  %313 = vmatprep.subr.mxu0 0.0
  %314 = vmatpush1.msra.mxu0 0.0
  %315 = vmatprep.subr.mxu0 0.0
  %316 = vmatpush1.msra.mxu0 0.0
  %317 = vmatprep.mubr.f32.mxu0 0.0
  %318 = vmatmul.mubr.f32.gmra.mrb[0].mxu0 %v251
  %v319 = vpop.f32.mrb[0].mxu0
  %v320 = vadd.f32 %v247, %v319
  %v321 = vpop.f32.mrb[0].mxu0
  %322 = vdwg.mxu0
  %v323 = vxor.u32 %v320, 2147483648
  %v324 = vmul.f32 %v323, 1.442695
  %v325 = vpow.pop %v324
  %v326 = vadd.f32 %v325, 1.0
  %v327 = vrcp.pop %v326
  %v328 = vmul.f32 1.0, %v327
  %v329 = vtanh.pop %v320
  %v330 = vmul.f32 %v328, 0.0
  %332 = vrot.lane.b32.xlu0 %v329, 64
  %v333 = vpop.permute.xlu0 %332
  %v335 = vmul.f32 %v328, %v333
  %337 = vrot.lane.b32.xlu0 %v335, 32
  %v338 = vpop.permute.xlu0 %337
  %v340 = vadd.f32 %v330, %v338
  %v341 = vtanh.pop %v340
  %343 = vrot.lane.b32.xlu0 %v341, 64
  %v344 = vpop.permute.xlu0 %343
  %v346 = vmul.f32 %v328, %v344
  %v347 = vlaneseq
  %v348 = vshrl.u32 %v347, 7
  %v349 = vsub.s32 0, %v348
  %v350 = vrot.slane %v139, %v349
  %352 = vrot.lane.b32.xlu0 %v350, 96
  %v353 = vpop.permute.xlu0 %352
  %v355 = vmul.f32 %v346, %v353
  %v356 = vadd.f32 %v355, 0.0
  %v357 = vsel %vm44, %v240, 0
  %359 = vmatprep.subr.mxu0 0.0
  %360 = vmatpush1.msra.mxu0 %v126
  %361 = vmatprep.subr.mxu0 0.0
  %362 = vmatpush1.msra.mxu0 %v127
  %363 = vmatprep.subr.mxu0 0.0
  %364 = vmatpush1.msra.mxu0 %v128
  %365 = vmatprep.subr.mxu0 0.0
  %366 = vmatpush1.msra.mxu0 %v129
  %367 = vmatprep.subr.mxu0 0.0
  %368 = vmatpush1.msra.mxu0 0.0
  %369 = vmatprep.subr.mxu0 0.0
  %370 = vmatpush1.msra.mxu0 0.0
  %371 = vmatprep.subr.mxu0 0.0
  %372 = vmatpush1.msra.mxu0 0.0
  %373 = vmatprep.subr.mxu0 0.0
  %374 = vmatpush1.msra.mxu0 0.0
  %375 = vmatprep.subr.mxu0 0.0
  %376 = vmatpush1.msra.mxu0 0.0
  %377 = vmatprep.subr.mxu0 0.0
  %378 = vmatpush1.msra.mxu0 0.0
  %379 = vmatprep.subr.mxu0 0.0
  %380 = vmatpush1.msra.mxu0 0.0
  %381 = vmatprep.subr.mxu0 0.0
  %382 = vmatpush1.msra.mxu0 0.0
  %383 = vmatprep.subr.mxu0 0.0
  %384 = vmatpush1.msra.mxu0 0.0
  %385 = vmatprep.subr.mxu0 0.0
  %386 = vmatpush1.msra.mxu0 0.0
  %387 = vmatprep.subr.mxu0 0.0
  %388 = vmatpush1.msra.mxu0 0.0
  %389 = vmatprep.subr.mxu0 0.0
  %390 = vmatpush1.msra.mxu0 0.0
  %391 = vmatprep.subr.mxu0 0.0
  %392 = vmatpush1.msra.mxu0 0.0
  %393 = vmatprep.subr.mxu0 0.0
  %394 = vmatpush1.msra.mxu0 0.0
  %395 = vmatprep.subr.mxu0 0.0
  %396 = vmatpush1.msra.mxu0 0.0
  %397 = vmatprep.subr.mxu0 0.0
  %398 = vmatpush1.msra.mxu0 0.0
  %399 = vmatprep.subr.mxu0 0.0
  %400 = vmatpush1.msra.mxu0 0.0
  %401 = vmatprep.subr.mxu0 0.0
  %402 = vmatpush1.msra.mxu0 0.0
  %403 = vmatprep.subr.mxu0 0.0
  %404 = vmatpush1.msra.mxu0 0.0
  %405 = vmatprep.subr.mxu0 0.0
  %406 = vmatpush1.msra.mxu0 0.0
  %407 = vmatprep.subr.mxu0 0.0
  %408 = vmatpush1.msra.mxu0 0.0
  %409 = vmatprep.subr.mxu0 0.0
  %410 = vmatpush1.msra.mxu0 0.0
  %411 = vmatprep.subr.mxu0 0.0
  %412 = vmatpush1.msra.mxu0 0.0
  %413 = vmatprep.subr.mxu0 0.0
  %414 = vmatpush1.msra.mxu0 0.0
  %415 = vmatprep.subr.mxu0 0.0
  %416 = vmatpush1.msra.mxu0 0.0
  %417 = vmatprep.subr.mxu0 0.0
  %418 = vmatpush1.msra.mxu0 0.0
  %419 = vmatprep.subr.mxu0 0.0
  %420 = vmatpush1.msra.mxu0 0.0
  %421 = vmatprep.subr.mxu0 0.0
  %422 = vmatpush1.msra.mxu0 0.0
  %423 = vmatprep.mubr.f32.mxu0 0.0
  %424 = vmatmul.mubr.f32.gmra.mrb[0].mxu0 %v357
  %v425 = vpop.f32.mrb[0].mxu0
  %v426 = vadd.f32 0.0, %v425
  %v427 = vpop.f32.mrb[0].mxu0
  %428 = vdwg.mxu0
  %v430 = vrot.slane %v426, 6
  %v432 = vadd.f32 %v118, %v430
  %v433 = vxor.u32 %v432, 2147483648
  %v434 = vmul.f32 %v433, 1.442695
  %v435 = vpow.pop %v434
  %v436 = vadd.f32 %v435, 1.0
  %v437 = vrcp.pop %v436
  %v438 = vmul.f32 1.0, %v437
  %v439 = vtanh.pop %v432
  %v441 = vrot.slane %v231, 6
  %v443 = vmul.f32 %v438, %v441
  %445 = vrot.lane.b32.xlu0 %v439, 64
  %v446 = vpop.permute.xlu0 %445
  %v448 = vmul.f32 %v438, %v446
  %450 = vrot.lane.b32.xlu0 %v448, 32
  %v451 = vpop.permute.xlu0 %450
  %v453 = vadd.f32 %v443, %v451
  %v454 = vtanh.pop %v453
  %456 = vrot.lane.b32.xlu0 %v454, 64
  %v457 = vpop.permute.xlu0 %456
  %v459 = vmul.f32 %v438, %v457
  %461 = vrot.lane.b32.xlu0 %v459, 32
  %v462 = vpop.permute.xlu0 %461
  %v465 = vrot.slane %v346, 6
  %466 = vrot.lane.b32.xlu0 %v465, 64
  %v467 = vpop.permute.xlu0 %466
  %v469 = vsel %vm44, %v462, %v467
  %v471 = vrot.slane %v469, 2
  %v472 = vsel %vm249, %v471, 0
  %474 = vmatprep.subr.mxu0 0.0
  %475 = vmatpush1.msra.mxu0 %v130
  %476 = vmatprep.subr.mxu0 0.0
  %477 = vmatpush1.msra.mxu0 %v131
  %478 = vmatprep.subr.mxu0 0.0
  %479 = vmatpush1.msra.mxu0 %v132
  %480 = vmatprep.subr.mxu0 0.0
  %481 = vmatpush1.msra.mxu0 %v133
  %482 = vmatprep.subr.mxu0 0.0
  %483 = vmatpush1.msra.mxu0 %v134
  %484 = vmatprep.subr.mxu0 0.0
  %485 = vmatpush1.msra.mxu0 %v135
  %486 = vmatprep.subr.mxu0 0.0
  %487 = vmatpush1.msra.mxu0 %v136
  %488 = vmatprep.subr.mxu0 0.0
  %489 = vmatpush1.msra.mxu0 %v137
  %490 = vmatprep.subr.mxu0 0.0
  %491 = vmatpush1.msra.mxu0 0.0
  %492 = vmatprep.subr.mxu0 0.0
  %493 = vmatpush1.msra.mxu0 0.0
  %494 = vmatprep.subr.mxu0 0.0
  %495 = vmatpush1.msra.mxu0 0.0
  %496 = vmatprep.subr.mxu0 0.0
  %497 = vmatpush1.msra.mxu0 0.0
  %498 = vmatprep.subr.mxu0 0.0
  %499 = vmatpush1.msra.mxu0 0.0
  %500 = vmatprep.subr.mxu0 0.0
  %501 = vmatpush1.msra.mxu0 0.0
  %502 = vmatprep.subr.mxu0 0.0
  %503 = vmatpush1.msra.mxu0 0.0
  %504 = vmatprep.subr.mxu0 0.0
  %505 = vmatpush1.msra.mxu0 0.0
  %506 = vmatprep.subr.mxu0 0.0
  %507 = vmatpush1.msra.mxu0 0.0
  %508 = vmatprep.subr.mxu0 0.0
  %509 = vmatpush1.msra.mxu0 0.0
  %510 = vmatprep.subr.mxu0 0.0
  %511 = vmatpush1.msra.mxu0 0.0
  %512 = vmatprep.subr.mxu0 0.0
  %513 = vmatpush1.msra.mxu0 0.0
  %514 = vmatprep.subr.mxu0 0.0
  %515 = vmatpush1.msra.mxu0 0.0
  %516 = vmatprep.subr.mxu0 0.0
  %517 = vmatpush1.msra.mxu0 0.0
  %518 = vmatprep.subr.mxu0 0.0
  %519 = vmatpush1.msra.mxu0 0.0
  %520 = vmatprep.subr.mxu0 0.0
  %521 = vmatpush1.msra.mxu0 0.0
  %522 = vmatprep.subr.mxu0 0.0
  %523 = vmatpush1.msra.mxu0 0.0
  %524 = vmatprep.subr.mxu0 0.0
  %525 = vmatpush1.msra.mxu0 0.0
  %526 = vmatprep.subr.mxu0 0.0
  %527 = vmatpush1.msra.mxu0 0.0
  %528 = vmatprep.subr.mxu0 0.0
  %529 = vmatpush1.msra.mxu0 0.0
  %530 = vmatprep.subr.mxu0 0.0
  %531 = vmatpush1.msra.mxu0 0.0
  %532 = vmatprep.subr.mxu0 0.0
  %533 = vmatpush1.msra.mxu0 0.0
  %534 = vmatprep.subr.mxu0 0.0
  %535 = vmatpush1.msra.mxu0 0.0
  %536 = vmatprep.subr.mxu0 0.0
  %537 = vmatpush1.msra.mxu0 0.0
  %538 = vmatprep.mubr.f32.mxu0 0.0
  %539 = vmatmul.mubr.f32.gmra.mrb[0].mxu0 %v472
  %v540 = vpop.f32.mrb[0].mxu0
  %v541 = vadd.f32 %v247, %v540
  %v542 = vpop.f32.mrb[0].mxu0
  %543 = vdwg.mxu0
  %v544 = vxor.u32 %v541, 2147483648
  %v545 = vmul.f32 %v544, 1.442695
  %v546 = vpow.pop %v545
  %v547 = vadd.f32 %v546, 1.0
  %v548 = vrcp.pop %v547
  %v549 = vmul.f32 1.0, %v548
  %v550 = vtanh.pop %v541
  %v551 = vmul.f32 %v549, %v340
  %553 = vrot.lane.b32.xlu0 %v550, 64
  %v554 = vpop.permute.xlu0 %553
  %v556 = vmul.f32 %v549, %v554
  %558 = vrot.lane.b32.xlu0 %v556, 32
  %v559 = vpop.permute.xlu0 %558
  %v561 = vadd.f32 %v551, %v559
  %v562 = vtanh.pop %v561
  %564 = vrot.lane.b32.xlu0 %v562, 64
  %v565 = vpop.permute.xlu0 %564
  %v567 = vmul.f32 %v549, %v565
  %v568 = vlaneseq
  %v569 = vshrl.u32 %v568, 7
  %v570 = vsub.s32 1, %v569
  %v571 = vrot.slane %v139, %v570
  %573 = vrot.lane.b32.xlu0 %v571, 96
  %v574 = vpop.permute.xlu0 %573
  %v576 = vmul.f32 %v567, %v574
  %v577 = vadd.f32 %v356, %v576
  %v578 = vrot.slane %v459, 2
  %579 = vrot.lane.b32.xlu0 %v578, 32
  %v580 = vpop.permute.xlu0 %579
  %v581 = vsel %vm44, %v580, 0
  %583 = vmatprep.subr.mxu0 0.0
  %584 = vmatpush1.msra.mxu0 %v126
  %585 = vmatprep.subr.mxu0 0.0
  %586 = vmatpush1.msra.mxu0 %v127
  %587 = vmatprep.subr.mxu0 0.0
  %588 = vmatpush1.msra.mxu0 %v128
  %589 = vmatprep.subr.mxu0 0.0
  %590 = vmatpush1.msra.mxu0 %v129
  %591 = vmatprep.subr.mxu0 0.0
  %592 = vmatpush1.msra.mxu0 0.0
  %593 = vmatprep.subr.mxu0 0.0
  %594 = vmatpush1.msra.mxu0 0.0
  %595 = vmatprep.subr.mxu0 0.0
  %596 = vmatpush1.msra.mxu0 0.0
  %597 = vmatprep.subr.mxu0 0.0
  %598 = vmatpush1.msra.mxu0 0.0
  %599 = vmatprep.subr.mxu0 0.0
  %600 = vmatpush1.msra.mxu0 0.0
  %601 = vmatprep.subr.mxu0 0.0
  %602 = vmatpush1.msra.mxu0 0.0
  %603 = vmatprep.subr.mxu0 0.0
  %604 = vmatpush1.msra.mxu0 0.0
  %605 = vmatprep.subr.mxu0 0.0
  %606 = vmatpush1.msra.mxu0 0.0
  %607 = vmatprep.subr.mxu0 0.0
  %608 = vmatpush1.msra.mxu0 0.0
  %609 = vmatprep.subr.mxu0 0.0
  %610 = vmatpush1.msra.mxu0 0.0
  %611 = vmatprep.subr.mxu0 0.0
  %612 = vmatpush1.msra.mxu0 0.0
  %613 = vmatprep.subr.mxu0 0.0
  %614 = vmatpush1.msra.mxu0 0.0
  %615 = vmatprep.subr.mxu0 0.0
  %616 = vmatpush1.msra.mxu0 0.0
  %617 = vmatprep.subr.mxu0 0.0
  %618 = vmatpush1.msra.mxu0 0.0
  %619 = vmatprep.subr.mxu0 0.0
  %620 = vmatpush1.msra.mxu0 0.0
  %621 = vmatprep.subr.mxu0 0.0
  %622 = vmatpush1.msra.mxu0 0.0
  %623 = vmatprep.subr.mxu0 0.0
  %624 = vmatpush1.msra.mxu0 0.0
  %625 = vmatprep.subr.mxu0 0.0
  %626 = vmatpush1.msra.mxu0 0.0
  %627 = vmatprep.subr.mxu0 0.0
  %628 = vmatpush1.msra.mxu0 0.0
  %629 = vmatprep.subr.mxu0 0.0
  %630 = vmatpush1.msra.mxu0 0.0
  %631 = vmatprep.subr.mxu0 0.0
  %632 = vmatpush1.msra.mxu0 0.0
  %633 = vmatprep.subr.mxu0 0.0
  %634 = vmatpush1.msra.mxu0 0.0
  %635 = vmatprep.subr.mxu0 0.0
  %636 = vmatpush1.msra.mxu0 0.0
  %637 = vmatprep.subr.mxu0 0.0
  %638 = vmatpush1.msra.mxu0 0.0
  %639 = vmatprep.subr.mxu0 0.0
  %640 = vmatpush1.msra.mxu0 0.0
  %641 = vmatprep.subr.mxu0 0.0
  %642 = vmatpush1.msra.mxu0 0.0
  %643 = vmatprep.subr.mxu0 0.0
  %644 = vmatpush1.msra.mxu0 0.0
  %645 = vmatprep.subr.mxu0 0.0
  %646 = vmatpush1.msra.mxu0 0.0
  %647 = vmatprep.mubr.f32.mxu0 0.0
  %648 = vmatmul.mubr.f32.gmra.mrb[0].mxu0 %v581
  %v649 = vpop.f32.mrb[0].mxu0
  %v650 = vadd.f32 0.0, %v649
  %v651 = vpop.f32.mrb[0].mxu0
  %652 = vdwg.mxu0
  %v654 = vrot.slane %v650, 4
  %v656 = vadd.f32 %v118, %v654
  %v657 = vxor.u32 %v656, 2147483648
  %v658 = vmul.f32 %v657, 1.442695
  %v659 = vpow.pop %v658
  %v660 = vadd.f32 %v659, 1.0
  %v661 = vrcp.pop %v660
  %v662 = vmul.f32 1.0, %v661
  %v663 = vtanh.pop %v656
  %v665 = vrot.slane %v453, 6
  %v667 = vmul.f32 %v662, %v665
  %669 = vrot.lane.b32.xlu0 %v663, 64
  %v670 = vpop.permute.xlu0 %669
  %v672 = vmul.f32 %v662, %v670
  %674 = vrot.lane.b32.xlu0 %v672, 32
  %v675 = vpop.permute.xlu0 %674
  %v677 = vadd.f32 %v667, %v675
  %v678 = vtanh.pop %v677
  %680 = vrot.lane.b32.xlu0 %v678, 64
  %v681 = vpop.permute.xlu0 %680
  %v683 = vmul.f32 %v662, %v681
  %685 = vrot.lane.b32.xlu0 %v683, 32
  %v686 = vpop.permute.xlu0 %685
  %v689 = vrot.slane %v567, 4
  %690 = vrot.lane.b32.xlu0 %v689, 64
  %v691 = vpop.permute.xlu0 %690
  %v693 = vsel %vm44, %v686, %v691
  %v695 = vrot.slane %v693, 4
  %v696 = vsel %vm249, %v695, 0
  %698 = vmatprep.subr.mxu0 0.0
  %699 = vmatpush1.msra.mxu0 %v130
  %700 = vmatprep.subr.mxu0 0.0
  %701 = vmatpush1.msra.mxu0 %v131
  %702 = vmatprep.subr.mxu0 0.0
  %703 = vmatpush1.msra.mxu0 %v132
  %704 = vmatprep.subr.mxu0 0.0
  %705 = vmatpush1.msra.mxu0 %v133
  %706 = vmatprep.subr.mxu0 0.0
  %707 = vmatpush1.msra.mxu0 %v134
  %708 = vmatprep.subr.mxu0 0.0
  %709 = vmatpush1.msra.mxu0 %v135
  %710 = vmatprep.subr.mxu0 0.0
  %711 = vmatpush1.msra.mxu0 %v136
  %712 = vmatprep.subr.mxu0 0.0
  %713 = vmatpush1.msra.mxu0 %v137
  %714 = vmatprep.subr.mxu0 0.0
  %715 = vmatpush1.msra.mxu0 0.0
  %716 = vmatprep.subr.mxu0 0.0
  %717 = vmatpush1.msra.mxu0 0.0
  %718 = vmatprep.subr.mxu0 0.0
  %719 = vmatpush1.msra.mxu0 0.0
  %720 = vmatprep.subr.mxu0 0.0
  %721 = vmatpush1.msra.mxu0 0.0
  %722 = vmatprep.subr.mxu0 0.0
  %723 = vmatpush1.msra.mxu0 0.0
  %724 = vmatprep.subr.mxu0 0.0
  %725 = vmatpush1.msra.mxu0 0.0
  %726 = vmatprep.subr.mxu0 0.0
  %727 = vmatpush1.msra.mxu0 0.0
  %728 = vmatprep.subr.mxu0 0.0
  %729 = vmatpush1.msra.mxu0 0.0
  %730 = vmatprep.subr.mxu0 0.0
  %731 = vmatpush1.msra.mxu0 0.0
  %732 = vmatprep.subr.mxu0 0.0
  %733 = vmatpush1.msra.mxu0 0.0
  %734 = vmatprep.subr.mxu0 0.0
  %735 = vmatpush1.msra.mxu0 0.0
  %736 = vmatprep.subr.mxu0 0.0
  %737 = vmatpush1.msra.mxu0 0.0
  %738 = vmatprep.subr.mxu0 0.0
  %739 = vmatpush1.msra.mxu0 0.0
  %740 = vmatprep.subr.mxu0 0.0
  %741 = vmatpush1.msra.mxu0 0.0
  %742 = vmatprep.subr.mxu0 0.0
  %743 = vmatpush1.msra.mxu0 0.0
  %744 = vmatprep.subr.mxu0 0.0
  %745 = vmatpush1.msra.mxu0 0.0
  %746 = vmatprep.subr.mxu0 0.0
  %747 = vmatpush1.msra.mxu0 0.0
  %748 = vmatprep.subr.mxu0 0.0
  %749 = vmatpush1.msra.mxu0 0.0
  %750 = vmatprep.subr.mxu0 0.0
  %751 = vmatpush1.msra.mxu0 0.0
  %752 = vmatprep.subr.mxu0 0.0
  %753 = vmatpush1.msra.mxu0 0.0
  %754 = vmatprep.subr.mxu0 0.0
  %755 = vmatpush1.msra.mxu0 0.0
  %756 = vmatprep.subr.mxu0 0.0
  %757 = vmatpush1.msra.mxu0 0.0
  %758 = vmatprep.subr.mxu0 0.0
  %759 = vmatpush1.msra.mxu0 0.0
  %760 = vmatprep.subr.mxu0 0.0
  %761 = vmatpush1.msra.mxu0 0.0
  %762 = vmatprep.mubr.f32.mxu0 0.0
  %763 = vmatmul.mubr.f32.gmra.mrb[0].mxu0 %v696
  %v764 = vpop.f32.mrb[0].mxu0
  %v765 = vadd.f32 %v247, %v764
  %v766 = vpop.f32.mrb[0].mxu0
  %767 = vdwg.mxu0
  %v768 = vxor.u32 %v765, 2147483648
  %v769 = vmul.f32 %v768, 1.442695
  %v770 = vpow.pop %v769
  %v771 = vadd.f32 %v770, 1.0
  %v772 = vrcp.pop %v771
  %v773 = vmul.f32 1.0, %v772
  %v774 = vtanh.pop %v765
  %v775 = vmul.f32 %v773, %v561
  %777 = vrot.lane.b32.xlu0 %v774, 64
  %v778 = vpop.permute.xlu0 %777
  %v780 = vmul.f32 %v773, %v778
  %782 = vrot.lane.b32.xlu0 %v780, 32
  %v783 = vpop.permute.xlu0 %782
  %v785 = vadd.f32 %v775, %v783
  %v786 = vtanh.pop %v785
  %788 = vrot.lane.b32.xlu0 %v786, 64
  %v789 = vpop.permute.xlu0 %788
  %v791 = vmul.f32 %v773, %v789
  %v792 = vlaneseq
  %v793 = vshrl.u32 %v792, 7
  %v794 = vsub.s32 2, %v793
  %v795 = vrot.slane %v139, %v794
  %797 = vrot.lane.b32.xlu0 %v795, 96
  %v798 = vpop.permute.xlu0 %797
  %v800 = vmul.f32 %v791, %v798
  %v801 = vadd.f32 %v577, %v800
  %v802 = vrot.slane %v683, 4
  %803 = vrot.lane.b32.xlu0 %v802, 32
  %v804 = vpop.permute.xlu0 %803
  %v805 = vsel %vm44, %v804, 0
  %807 = vmatprep.subr.mxu0 0.0
  %808 = vmatpush1.msra.mxu0 %v126
  %809 = vmatprep.subr.mxu0 0.0
  %810 = vmatpush1.msra.mxu0 %v127
  %811 = vmatprep.subr.mxu0 0.0
  %812 = vmatpush1.msra.mxu0 %v128
  %813 = vmatprep.subr.mxu0 0.0
  %814 = vmatpush1.msra.mxu0 %v129
  %815 = vmatprep.subr.mxu0 0.0
  %816 = vmatpush1.msra.mxu0 0.0
  %817 = vmatprep.subr.mxu0 0.0
  %818 = vmatpush1.msra.mxu0 0.0
  %819 = vmatprep.subr.mxu0 0.0
  %820 = vmatpush1.msra.mxu0 0.0
  %821 = vmatprep.subr.mxu0 0.0
  %822 = vmatpush1.msra.mxu0 0.0
  %823 = vmatprep.subr.mxu0 0.0
  %824 = vmatpush1.msra.mxu0 0.0
  %825 = vmatprep.subr.mxu0 0.0
  %826 = vmatpush1.msra.mxu0 0.0
  %827 = vmatprep.subr.mxu0 0.0
  %828 = vmatpush1.msra.mxu0 0.0
  %829 = vmatprep.subr.mxu0 0.0
  %830 = vmatpush1.msra.mxu0 0.0
  %831 = vmatprep.subr.mxu0 0.0
  %832 = vmatpush1.msra.mxu0 0.0
  %833 = vmatprep.subr.mxu0 0.0
  %834 = vmatpush1.msra.mxu0 0.0
  %835 = vmatprep.subr.mxu0 0.0
  %836 = vmatpush1.msra.mxu0 0.0
  %837 = vmatprep.subr.mxu0 0.0
  %838 = vmatpush1.msra.mxu0 0.0
  %839 = vmatprep.subr.mxu0 0.0
  %840 = vmatpush1.msra.mxu0 0.0
  %841 = vmatprep.subr.mxu0 0.0
  %842 = vmatpush1.msra.mxu0 0.0
  %843 = vmatprep.subr.mxu0 0.0
  %844 = vmatpush1.msra.mxu0 0.0
  %845 = vmatprep.subr.mxu0 0.0
  %846 = vmatpush1.msra.mxu0 0.0
  %847 = vmatprep.subr.mxu0 0.0
  %848 = vmatpush1.msra.mxu0 0.0
  %849 = vmatprep.subr.mxu0 0.0
  %850 = vmatpush1.msra.mxu0 0.0
  %851 = vmatprep.subr.mxu0 0.0
  %852 = vmatpush1.msra.mxu0 0.0
  %853 = vmatprep.subr.mxu0 0.0
  %854 = vmatpush1.msra.mxu0 0.0
  %855 = vmatprep.subr.mxu0 0.0
  %856 = vmatpush1.msra.mxu0 0.0
  %857 = vmatprep.subr.mxu0 0.0
  %858 = vmatpush1.msra.mxu0 0.0
  %859 = vmatprep.subr.mxu0 0.0
  %860 = vmatpush1.msra.mxu0 0.0
  %861 = vmatprep.subr.mxu0 0.0
  %862 = vmatpush1.msra.mxu0 0.0
  %863 = vmatprep.subr.mxu0 0.0
  %864 = vmatpush1.msra.mxu0 0.0
  %865 = vmatprep.subr.mxu0 0.0
  %866 = vmatpush1.msra.mxu0 0.0
  %867 = vmatprep.subr.mxu0 0.0
  %868 = vmatpush1.msra.mxu0 0.0
  %869 = vmatprep.subr.mxu0 0.0
  %870 = vmatpush1.msra.mxu0 0.0
  %871 = vmatprep.mubr.f32.mxu0 0.0
  %872 = vmatmul.mubr.f32.gmra.mrb[0].mxu0 %v805
  %v873 = vpop.f32.mrb[0].mxu0
  %v874 = vadd.f32 0.0, %v873
  %v875 = vpop.f32.mrb[0].mxu0
  %876 = vdwg.mxu0
  %v878 = vrot.slane %v874, 2
  %v880 = vadd.f32 %v118, %v878
  %v881 = vxor.u32 %v880, 2147483648
  %v882 = vmul.f32 %v881, 1.442695
  %v883 = vpow.pop %v882
  %v884 = vadd.f32 %v883, 1.0
  %v885 = vrcp.pop %v884
  %v886 = vmul.f32 1.0, %v885
  %v887 = vtanh.pop %v880
  %v889 = vrot.slane %v677, 6
  %v891 = vmul.f32 %v886, %v889
  %893 = vrot.lane.b32.xlu0 %v887, 64
  %v894 = vpop.permute.xlu0 %893
  %v896 = vmul.f32 %v886, %v894
  %898 = vrot.lane.b32.xlu0 %v896, 32
  %v899 = vpop.permute.xlu0 %898
  %v901 = vadd.f32 %v891, %v899
  %v902 = vtanh.pop %v901
  %904 = vrot.lane.b32.xlu0 %v902, 64
  %v905 = vpop.permute.xlu0 %904
  %v907 = vmul.f32 %v886, %v905
  %909 = vrot.lane.b32.xlu0 %v907, 32
  %v910 = vpop.permute.xlu0 %909
  %v913 = vrot.slane %v791, 2
  %914 = vrot.lane.b32.xlu0 %v913, 64
  %v915 = vpop.permute.xlu0 %914
  %v917 = vsel %vm44, %v910, %v915
  %v919 = vrot.slane %v917, 6
  %v920 = vsel %vm249, %v919, 0
  %922 = vmatprep.subr.mxu0 0.0
  %923 = vmatpush1.msra.mxu0 %v130
  %924 = vmatprep.subr.mxu0 0.0
  %925 = vmatpush1.msra.mxu0 %v131
  %926 = vmatprep.subr.mxu0 0.0
  %927 = vmatpush1.msra.mxu0 %v132
  %928 = vmatprep.subr.mxu0 0.0
  %929 = vmatpush1.msra.mxu0 %v133
  %930 = vmatprep.subr.mxu0 0.0
  %931 = vmatpush1.msra.mxu0 %v134
  %932 = vmatprep.subr.mxu0 0.0
  %933 = vmatpush1.msra.mxu0 %v135
  %934 = vmatprep.subr.mxu0 0.0
  %935 = vmatpush1.msra.mxu0 %v136
  %936 = vmatprep.subr.mxu0 0.0
  %937 = vmatpush1.msra.mxu0 %v137
  %938 = vmatprep.subr.mxu0 0.0
  %939 = vmatpush1.msra.mxu0 0.0
  %940 = vmatprep.subr.mxu0 0.0
  %941 = vmatpush1.msra.mxu0 0.0
  %942 = vmatprep.subr.mxu0 0.0
  %943 = vmatpush1.msra.mxu0 0.0
  %944 = vmatprep.subr.mxu0 0.0
  %945 = vmatpush1.msra.mxu0 0.0
  %946 = vmatprep.subr.mxu0 0.0
  %947 = vmatpush1.msra.mxu0 0.0
  %948 = vmatprep.subr.mxu0 0.0
  %949 = vmatpush1.msra.mxu0 0.0
  %950 = vmatprep.subr.mxu0 0.0
  %951 = vmatpush1.msra.mxu0 0.0
  %952 = vmatprep.subr.mxu0 0.0
  %953 = vmatpush1.msra.mxu0 0.0
  %954 = vmatprep.subr.mxu0 0.0
  %955 = vmatpush1.msra.mxu0 0.0
  %956 = vmatprep.subr.mxu0 0.0
  %957 = vmatpush1.msra.mxu0 0.0
  %958 = vmatprep.subr.mxu0 0.0
  %959 = vmatpush1.msra.mxu0 0.0
  %960 = vmatprep.subr.mxu0 0.0
  %961 = vmatpush1.msra.mxu0 0.0
  %962 = vmatprep.subr.mxu0 0.0
  %963 = vmatpush1.msra.mxu0 0.0
  %964 = vmatprep.subr.mxu0 0.0
  %965 = vmatpush1.msra.mxu0 0.0
  %966 = vmatprep.subr.mxu0 0.0
  %967 = vmatpush1.msra.mxu0 0.0
  %968 = vmatprep.subr.mxu0 0.0
  %969 = vmatpush1.msra.mxu0 0.0
  %970 = vmatprep.subr.mxu0 0.0
  %971 = vmatpush1.msra.mxu0 0.0
  %972 = vmatprep.subr.mxu0 0.0
  %973 = vmatpush1.msra.mxu0 0.0
  %974 = vmatprep.subr.mxu0 0.0
  %975 = vmatpush1.msra.mxu0 0.0
  %976 = vmatprep.subr.mxu0 0.0
  %977 = vmatpush1.msra.mxu0 0.0
  %978 = vmatprep.subr.mxu0 0.0
  %979 = vmatpush1.msra.mxu0 0.0
  %980 = vmatprep.subr.mxu0 0.0
  %981 = vmatpush1.msra.mxu0 0.0
  %982 = vmatprep.subr.mxu0 0.0
  %983 = vmatpush1.msra.mxu0 0.0
  %984 = vmatprep.subr.mxu0 0.0
  %985 = vmatpush1.msra.mxu0 0.0
  %986 = vmatprep.mubr.f32.mxu0 0.0
  %987 = vmatmul.mubr.f32.gmra.mrb[0].mxu0 %v920
  %v988 = vpop.f32.mrb[0].mxu0
  %v989 = vadd.f32 %v247, %v988
  %v990 = vpop.f32.mrb[0].mxu0
  %991 = vdwg.mxu0
  %v992 = vxor.u32 %v989, 2147483648
  %v993 = vmul.f32 %v992, 1.442695
  %v994 = vpow.pop %v993
  %v995 = vadd.f32 %v994, 1.0
  %v996 = vrcp.pop %v995
  %v997 = vmul.f32 1.0, %v996
  %v998 = vtanh.pop %v989
  %v999 = vmul.f32 %v997, %v785
  %1001 = vrot.lane.b32.xlu0 %v998, 64
  %v1002 = vpop.permute.xlu0 %1001
  %v1004 = vmul.f32 %v997, %v1002
  %1006 = vrot.lane.b32.xlu0 %v1004, 32
  %v1007 = vpop.permute.xlu0 %1006
  %v1009 = vadd.f32 %v999, %v1007
  %v1010 = vtanh.pop %v1009
  %1012 = vrot.lane.b32.xlu0 %v1010, 64
  %v1013 = vpop.permute.xlu0 %1012
  %v1015 = vmul.f32 %v997, %v1013
  %v1016 = vlaneseq
  %v1017 = vshrl.u32 %v1016, 7
  %v1018 = vsub.s32 3, %v1017
  %v1019 = vrot.slane %v139, %v1018
  %1021 = vrot.lane.b32.xlu0 %v1019, 96
  %v1022 = vpop.permute.xlu0 %1021
  %v1024 = vmul.f32 %v1015, %v1022
  %v1025 = vadd.f32 %v801, %v1024
  %v1026 = vrot.slane %v907, 6
  %1027 = vrot.lane.b32.xlu0 %v1026, 32
  %v1028 = vpop.permute.xlu0 %1027
  %v1029 = vsel %vm44, %v1028, 0
  %1031 = vmatprep.subr.mxu0 0.0
  %1032 = vmatpush1.msra.mxu0 %v126
  %1033 = vmatprep.subr.mxu0 0.0
  %1034 = vmatpush1.msra.mxu0 %v127
  %1035 = vmatprep.subr.mxu0 0.0
  %1036 = vmatpush1.msra.mxu0 %v128
  %1037 = vmatprep.subr.mxu0 0.0
  %1038 = vmatpush1.msra.mxu0 %v129
  %1039 = vmatprep.subr.mxu0 0.0
  %1040 = vmatpush1.msra.mxu0 0.0
  %1041 = vmatprep.subr.mxu0 0.0
  %1042 = vmatpush1.msra.mxu0 0.0
  %1043 = vmatprep.subr.mxu0 0.0
  %1044 = vmatpush1.msra.mxu0 0.0
  %1045 = vmatprep.subr.mxu0 0.0
  %1046 = vmatpush1.msra.mxu0 0.0
  %1047 = vmatprep.subr.mxu0 0.0
  %1048 = vmatpush1.msra.mxu0 0.0
  %1049 = vmatprep.subr.mxu0 0.0
  %1050 = vmatpush1.msra.mxu0 0.0
  %1051 = vmatprep.subr.mxu0 0.0
  %1052 = vmatpush1.msra.mxu0 0.0
  %1053 = vmatprep.subr.mxu0 0.0
  %1054 = vmatpush1.msra.mxu0 0.0
  %1055 = vmatprep.subr.mxu0 0.0
  %1056 = vmatpush1.msra.mxu0 0.0
  %1057 = vmatprep.subr.mxu0 0.0
  %1058 = vmatpush1.msra.mxu0 0.0
  %1059 = vmatprep.subr.mxu0 0.0
  %1060 = vmatpush1.msra.mxu0 0.0
  %1061 = vmatprep.subr.mxu0 0.0
  %1062 = vmatpush1.msra.mxu0 0.0
  %1063 = vmatprep.subr.mxu0 0.0
  %1064 = vmatpush1.msra.mxu0 0.0
  %1065 = vmatprep.subr.mxu0 0.0
  %1066 = vmatpush1.msra.mxu0 0.0
  %1067 = vmatprep.subr.mxu0 0.0
  %1068 = vmatpush1.msra.mxu0 0.0
  %1069 = vmatprep.subr.mxu0 0.0
  %1070 = vmatpush1.msra.mxu0 0.0
  %1071 = vmatprep.subr.mxu0 0.0
  %1072 = vmatpush1.msra.mxu0 0.0
  %1073 = vmatprep.subr.mxu0 0.0
  %1074 = vmatpush1.msra.mxu0 0.0
  %1075 = vmatprep.subr.mxu0 0.0
  %1076 = vmatpush1.msra.mxu0 0.0
  %1077 = vmatprep.subr.mxu0 0.0
  %1078 = vmatpush1.msra.mxu0 0.0
  %1079 = vmatprep.subr.mxu0 0.0
  %1080 = vmatpush1.msra.mxu0 0.0
  %1081 = vmatprep.subr.mxu0 0.0
  %1082 = vmatpush1.msra.mxu0 0.0
  %1083 = vmatprep.subr.mxu0 0.0
  %1084 = vmatpush1.msra.mxu0 0.0
  %1085 = vmatprep.subr.mxu0 0.0
  %1086 = vmatpush1.msra.mxu0 0.0
  %1087 = vmatprep.subr.mxu0 0.0
  %1088 = vmatpush1.msra.mxu0 0.0
  %1089 = vmatprep.subr.mxu0 0.0
  %1090 = vmatpush1.msra.mxu0 0.0
  %1091 = vmatprep.subr.mxu0 0.0
  %1092 = vmatpush1.msra.mxu0 0.0
  %1093 = vmatprep.subr.mxu0 0.0
  %1094 = vmatpush1.msra.mxu0 0.0
  %1095 = vmatprep.mubr.f32.mxu0 0.0
  %1096 = vmatmul.mubr.f32.gmra.mrb[0].mxu0 %v1029
  %v1097 = vpop.f32.mrb[0].mxu0
  %v1098 = vadd.f32 0.0, %v1097
  %v1099 = vpop.f32.mrb[0].mxu0
  %1100 = vdwg.mxu0
  %v1101 = vadd.f32 %v123, %v1098
  %v1102 = vxor.u32 %v1101, 2147483648
  %v1103 = vmul.f32 %v1102, 1.442695
  %v1104 = vpow.pop %v1103
  %v1105 = vadd.f32 %v1104, 1.0
  %v1106 = vrcp.pop %v1105
  %v1107 = vmul.f32 1.0, %v1106
  %v1108 = vtanh.pop %v1101
  %v1110 = vrot.slane %v901, 6
  %v1112 = vmul.f32 %v1107, %v1110
  %1114 = vrot.lane.b32.xlu0 %v1108, 64
  %v1115 = vpop.permute.xlu0 %1114
  %v1117 = vmul.f32 %v1107, %v1115
  %1119 = vrot.lane.b32.xlu0 %v1117, 32
  %v1120 = vpop.permute.xlu0 %1119
  %v1122 = vadd.f32 %v1112, %v1120
  %v1123 = vtanh.pop %v1122
  %1125 = vrot.lane.b32.xlu0 %v1123, 64
  %v1126 = vpop.permute.xlu0 %1125
  %v1128 = vmul.f32 %v1107, %v1126
  %1130 = vrot.lane.b32.xlu0 %v1128, 32
  %v1131 = vpop.permute.xlu0 %1130
  %1134 = vrot.lane.b32.xlu0 %v1015, 64
  %v1135 = vpop.permute.xlu0 %1134
  %v1137 = vsel %vm44, %v1131, %v1135
  %v1139 = vsel %vm249, %v1137, 0
  %1141 = vmatprep.subr.mxu0 0.0
  %1142 = vmatpush1.msra.mxu0 %v130
  %1143 = vmatprep.subr.mxu0 0.0
  %1144 = vmatpush1.msra.mxu0 %v131
  %1145 = vmatprep.subr.mxu0 0.0
  %1146 = vmatpush1.msra.mxu0 %v132
  %1147 = vmatprep.subr.mxu0 0.0
  %1148 = vmatpush1.msra.mxu0 %v133
  %1149 = vmatprep.subr.mxu0 0.0
  %1150 = vmatpush1.msra.mxu0 %v134
  %1151 = vmatprep.subr.mxu0 0.0
  %1152 = vmatpush1.msra.mxu0 %v135
  %1153 = vmatprep.subr.mxu0 0.0
  %1154 = vmatpush1.msra.mxu0 %v136
  %1155 = vmatprep.subr.mxu0 0.0
  %1156 = vmatpush1.msra.mxu0 %v137
  %1157 = vmatprep.subr.mxu0 0.0
  %1158 = vmatpush1.msra.mxu0 0.0
  %1159 = vmatprep.subr.mxu0 0.0
  %1160 = vmatpush1.msra.mxu0 0.0
  %1161 = vmatprep.subr.mxu0 0.0
  %1162 = vmatpush1.msra.mxu0 0.0
  %1163 = vmatprep.subr.mxu0 0.0
  %1164 = vmatpush1.msra.mxu0 0.0
  %1165 = vmatprep.subr.mxu0 0.0
  %1166 = vmatpush1.msra.mxu0 0.0
  %1167 = vmatprep.subr.mxu0 0.0
  %1168 = vmatpush1.msra.mxu0 0.0
  %1169 = vmatprep.subr.mxu0 0.0
  %1170 = vmatpush1.msra.mxu0 0.0
  %1171 = vmatprep.subr.mxu0 0.0
  %1172 = vmatpush1.msra.mxu0 0.0
  %1173 = vmatprep.subr.mxu0 0.0
  %1174 = vmatpush1.msra.mxu0 0.0
  %1175 = vmatprep.subr.mxu0 0.0
  %1176 = vmatpush1.msra.mxu0 0.0
  %1177 = vmatprep.subr.mxu0 0.0
  %1178 = vmatpush1.msra.mxu0 0.0
  %1179 = vmatprep.subr.mxu0 0.0
  %1180 = vmatpush1.msra.mxu0 0.0
  %1181 = vmatprep.subr.mxu0 0.0
  %1182 = vmatpush1.msra.mxu0 0.0
  %1183 = vmatprep.subr.mxu0 0.0
  %1184 = vmatpush1.msra.mxu0 0.0
  %1185 = vmatprep.subr.mxu0 0.0
  %1186 = vmatpush1.msra.mxu0 0.0
  %1187 = vmatprep.subr.mxu0 0.0
  %1188 = vmatpush1.msra.mxu0 0.0
  %1189 = vmatprep.subr.mxu0 0.0
  %1190 = vmatpush1.msra.mxu0 0.0
  %1191 = vmatprep.subr.mxu0 0.0
  %1192 = vmatpush1.msra.mxu0 0.0
  %1193 = vmatprep.subr.mxu0 0.0
  %1194 = vmatpush1.msra.mxu0 0.0
  %1195 = vmatprep.subr.mxu0 0.0
  %1196 = vmatpush1.msra.mxu0 0.0
  %1197 = vmatprep.subr.mxu0 0.0
  %1198 = vmatpush1.msra.mxu0 0.0
  %1199 = vmatprep.subr.mxu0 0.0
  %1200 = vmatpush1.msra.mxu0 0.0
  %1201 = vmatprep.subr.mxu0 0.0
  %1202 = vmatpush1.msra.mxu0 0.0
  %1203 = vmatprep.subr.mxu0 0.0
  %1204 = vmatpush1.msra.mxu0 0.0
  %1205 = vmatprep.mubr.f32.mxu0 0.0
  %1206 = vmatmul.mubr.f32.gmra.mrb[0].mxu0 %v1139
  %v1207 = vpop.f32.mrb[0].mxu0
  %v1208 = vadd.f32 %v247, %v1207
  %v1209 = vpop.f32.mrb[0].mxu0
  %1210 = vdwg.mxu0
  %v1211 = vxor.u32 %v1208, 2147483648
  %v1212 = vmul.f32 %v1211, 1.442695
  %v1213 = vpow.pop %v1212
  %v1214 = vadd.f32 %v1213, 1.0
  %v1215 = vrcp.pop %v1214
  %v1216 = vmul.f32 1.0, %v1215
  %v1217 = vtanh.pop %v1208
  %v1218 = vmul.f32 %v1216, %v1009
  %1220 = vrot.lane.b32.xlu0 %v1217, 64
  %v1221 = vpop.permute.xlu0 %1220
  %v1223 = vmul.f32 %v1216, %v1221
  %1225 = vrot.lane.b32.xlu0 %v1223, 32
  %v1226 = vpop.permute.xlu0 %1225
  %v1228 = vadd.f32 %v1218, %v1226
  %v1229 = vtanh.pop %v1228
  %1231 = vrot.lane.b32.xlu0 %v1229, 64
  %v1232 = vpop.permute.xlu0 %1231
  %v1234 = vmul.f32 %v1216, %v1232
  %v1235 = vlaneseq
  %v1236 = vshrl.u32 %v1235, 7
  %v1237 = vsub.s32 4, %v1236
  %v1238 = vrot.slane %v139, %v1237
  %1240 = vrot.lane.b32.xlu0 %v1238, 96
  %v1241 = vpop.permute.xlu0 %1240
  %v1243 = vmul.f32 %v1234, %v1241
  %v1244 = vadd.f32 %v1025, %v1243
  %v1245 = vsel %vm44, %v1131, 0
  %1247 = vmatprep.subr.mxu0 0.0
  %1248 = vmatpush1.msra.mxu0 %v126
  %1249 = vmatprep.subr.mxu0 0.0
  %1250 = vmatpush1.msra.mxu0 %v127
  %1251 = vmatprep.subr.mxu0 0.0
  %1252 = vmatpush1.msra.mxu0 %v128
  %1253 = vmatprep.subr.mxu0 0.0
  %1254 = vmatpush1.msra.mxu0 %v129
  %1255 = vmatprep.subr.mxu0 0.0
  %1256 = vmatpush1.msra.mxu0 0.0
  %1257 = vmatprep.subr.mxu0 0.0
  %1258 = vmatpush1.msra.mxu0 0.0
  %1259 = vmatprep.subr.mxu0 0.0
  %1260 = vmatpush1.msra.mxu0 0.0
  %1261 = vmatprep.subr.mxu0 0.0
  %1262 = vmatpush1.msra.mxu0 0.0
  %1263 = vmatprep.subr.mxu0 0.0
  %1264 = vmatpush1.msra.mxu0 0.0
  %1265 = vmatprep.subr.mxu0 0.0
  %1266 = vmatpush1.msra.mxu0 0.0
  %1267 = vmatprep.subr.mxu0 0.0
  %1268 = vmatpush1.msra.mxu0 0.0
  %1269 = vmatprep.subr.mxu0 0.0
  %1270 = vmatpush1.msra.mxu0 0.0
  %1271 = vmatprep.subr.mxu0 0.0
  %1272 = vmatpush1.msra.mxu0 0.0
  %1273 = vmatprep.subr.mxu0 0.0
  %1274 = vmatpush1.msra.mxu0 0.0
  %1275 = vmatprep.subr.mxu0 0.0
  %1276 = vmatpush1.msra.mxu0 0.0
  %1277 = vmatprep.subr.mxu0 0.0
  %1278 = vmatpush1.msra.mxu0 0.0
  %1279 = vmatprep.subr.mxu0 0.0
  %1280 = vmatpush1.msra.mxu0 0.0
  %1281 = vmatprep.subr.mxu0 0.0
  %1282 = vmatpush1.msra.mxu0 0.0
  %1283 = vmatprep.subr.mxu0 0.0
  %1284 = vmatpush1.msra.mxu0 0.0
  %1285 = vmatprep.subr.mxu0 0.0
  %1286 = vmatpush1.msra.mxu0 0.0
  %1287 = vmatprep.subr.mxu0 0.0
  %1288 = vmatpush1.msra.mxu0 0.0
  %1289 = vmatprep.subr.mxu0 0.0
  %1290 = vmatpush1.msra.mxu0 0.0
  %1291 = vmatprep.subr.mxu0 0.0
  %1292 = vmatpush1.msra.mxu0 0.0
  %1293 = vmatprep.subr.mxu0 0.0
  %1294 = vmatpush1.msra.mxu0 0.0
  %1295 = vmatprep.subr.mxu0 0.0
  %1296 = vmatpush1.msra.mxu0 0.0
  %1297 = vmatprep.subr.mxu0 0.0
  %1298 = vmatpush1.msra.mxu0 0.0
  %1299 = vmatprep.subr.mxu0 0.0
  %1300 = vmatpush1.msra.mxu0 0.0
  %1301 = vmatprep.subr.mxu0 0.0
  %1302 = vmatpush1.msra.mxu0 0.0
  %1303 = vmatprep.subr.mxu0 0.0
  %1304 = vmatpush1.msra.mxu0 0.0
  %1305 = vmatprep.subr.mxu0 0.0
  %1306 = vmatpush1.msra.mxu0 0.0
  %1307 = vmatprep.subr.mxu0 0.0
  %1308 = vmatpush1.msra.mxu0 0.0
  %1309 = vmatprep.subr.mxu0 0.0
  %1310 = vmatpush1.msra.mxu0 0.0
  %1311 = vmatprep.mubr.f32.mxu0 0.0
  %1312 = vmatmul.mubr.f32.gmra.mrb[0].mxu0 %v1245
  %v1313 = vpop.f32.mrb[0].mxu0
  %v1314 = vadd.f32 0.0, %v1313
  %v1315 = vpop.f32.mrb[0].mxu0
  %1316 = vdwg.mxu0
  %v1318 = vrot.slane %v1314, 6
  %v1320 = vadd.f32 %v123, %v1318
  %v1321 = vxor.u32 %v1320, 2147483648
  %v1322 = vmul.f32 %v1321, 1.442695
  %v1323 = vpow.pop %v1322
  %v1324 = vadd.f32 %v1323, 1.0
  %v1325 = vrcp.pop %v1324
  %v1326 = vmul.f32 1.0, %v1325
  %v1327 = vtanh.pop %v1320
  %v1329 = vrot.slane %v1122, 6
  %v1331 = vmul.f32 %v1326, %v1329
  %1333 = vrot.lane.b32.xlu0 %v1327, 64
  %v1334 = vpop.permute.xlu0 %1333
  %v1336 = vmul.f32 %v1326, %v1334
  %1338 = vrot.lane.b32.xlu0 %v1336, 32
  %v1339 = vpop.permute.xlu0 %1338
  %v1341 = vadd.f32 %v1331, %v1339
  %v1342 = vtanh.pop %v1341
  %1344 = vrot.lane.b32.xlu0 %v1342, 64
  %v1345 = vpop.permute.xlu0 %1344
  %v1347 = vmul.f32 %v1326, %v1345
  %1349 = vrot.lane.b32.xlu0 %v1347, 32
  %v1350 = vpop.permute.xlu0 %1349
  %v1353 = vrot.slane %v1234, 6
  %1354 = vrot.lane.b32.xlu0 %v1353, 64
  %v1355 = vpop.permute.xlu0 %1354
  %v1357 = vsel %vm44, %v1350, %v1355
  %v1359 = vrot.slane %v1357, 2
  %v1360 = vsel %vm249, %v1359, 0
  %1362 = vmatprep.subr.mxu0 0.0
  %1363 = vmatpush1.msra.mxu0 %v130
  %1364 = vmatprep.subr.mxu0 0.0
  %1365 = vmatpush1.msra.mxu0 %v131
  %1366 = vmatprep.subr.mxu0 0.0
  %1367 = vmatpush1.msra.mxu0 %v132
  %1368 = vmatprep.subr.mxu0 0.0
  %1369 = vmatpush1.msra.mxu0 %v133
  %1370 = vmatprep.subr.mxu0 0.0
  %1371 = vmatpush1.msra.mxu0 %v134
  %1372 = vmatprep.subr.mxu0 0.0
  %1373 = vmatpush1.msra.mxu0 %v135
  %1374 = vmatprep.subr.mxu0 0.0
  %1375 = vmatpush1.msra.mxu0 %v136
  %1376 = vmatprep.subr.mxu0 0.0
  %1377 = vmatpush1.msra.mxu0 %v137
  %1378 = vmatprep.subr.mxu0 0.0
  %1379 = vmatpush1.msra.mxu0 0.0
  %1380 = vmatprep.subr.mxu0 0.0
  %1381 = vmatpush1.msra.mxu0 0.0
  %1382 = vmatprep.subr.mxu0 0.0
  %1383 = vmatpush1.msra.mxu0 0.0
  %1384 = vmatprep.subr.mxu0 0.0
  %1385 = vmatpush1.msra.mxu0 0.0
  %1386 = vmatprep.subr.mxu0 0.0
  %1387 = vmatpush1.msra.mxu0 0.0
  %1388 = vmatprep.subr.mxu0 0.0
  %1389 = vmatpush1.msra.mxu0 0.0
  %1390 = vmatprep.subr.mxu0 0.0
  %1391 = vmatpush1.msra.mxu0 0.0
  %1392 = vmatprep.subr.mxu0 0.0
  %1393 = vmatpush1.msra.mxu0 0.0
  %1394 = vmatprep.subr.mxu0 0.0
  %1395 = vmatpush1.msra.mxu0 0.0
  %1396 = vmatprep.subr.mxu0 0.0
  %1397 = vmatpush1.msra.mxu0 0.0
  %1398 = vmatprep.subr.mxu0 0.0
  %1399 = vmatpush1.msra.mxu0 0.0
  %1400 = vmatprep.subr.mxu0 0.0
  %1401 = vmatpush1.msra.mxu0 0.0
  %1402 = vmatprep.subr.mxu0 0.0
  %1403 = vmatpush1.msra.mxu0 0.0
  %1404 = vmatprep.subr.mxu0 0.0
  %1405 = vmatpush1.msra.mxu0 0.0
  %1406 = vmatprep.subr.mxu0 0.0
  %1407 = vmatpush1.msra.mxu0 0.0
  %1408 = vmatprep.subr.mxu0 0.0
  %1409 = vmatpush1.msra.mxu0 0.0
  %1410 = vmatprep.subr.mxu0 0.0
  %1411 = vmatpush1.msra.mxu0 0.0
  %1412 = vmatprep.subr.mxu0 0.0
  %1413 = vmatpush1.msra.mxu0 0.0
  %1414 = vmatprep.subr.mxu0 0.0
  %1415 = vmatpush1.msra.mxu0 0.0
  %1416 = vmatprep.subr.mxu0 0.0
  %1417 = vmatpush1.msra.mxu0 0.0
  %1418 = vmatprep.subr.mxu0 0.0
  %1419 = vmatpush1.msra.mxu0 0.0
  %1420 = vmatprep.subr.mxu0 0.0
  %1421 = vmatpush1.msra.mxu0 0.0
  %1422 = vmatprep.subr.mxu0 0.0
  %1423 = vmatpush1.msra.mxu0 0.0
  %1424 = vmatprep.subr.mxu0 0.0
  %1425 = vmatpush1.msra.mxu0 0.0
  %1426 = vmatprep.mubr.f32.mxu0 0.0
  %1427 = vmatmul.mubr.f32.gmra.mrb[0].mxu0 %v1360
  %v1428 = vpop.f32.mrb[0].mxu0
  %v1429 = vadd.f32 %v247, %v1428
  %v1430 = vpop.f32.mrb[0].mxu0
  %1431 = vdwg.mxu0
  %v1432 = vxor.u32 %v1429, 2147483648
  %v1433 = vmul.f32 %v1432, 1.442695
  %v1434 = vpow.pop %v1433
  %v1435 = vadd.f32 %v1434, 1.0
  %v1436 = vrcp.pop %v1435
  %v1437 = vmul.f32 1.0, %v1436
  %v1438 = vtanh.pop %v1429
  %v1439 = vmul.f32 %v1437, %v1228
  %1441 = vrot.lane.b32.xlu0 %v1438, 64
  %v1442 = vpop.permute.xlu0 %1441
  %v1444 = vmul.f32 %v1437, %v1442
  %1446 = vrot.lane.b32.xlu0 %v1444, 32
  %v1447 = vpop.permute.xlu0 %1446
  %v1449 = vadd.f32 %v1439, %v1447
  %v1450 = vtanh.pop %v1449
  %1452 = vrot.lane.b32.xlu0 %v1450, 64
  %v1453 = vpop.permute.xlu0 %1452
  %v1455 = vmul.f32 %v1437, %v1453
  %v1456 = vlaneseq
  %v1457 = vshrl.u32 %v1456, 7
  %v1458 = vsub.s32 5, %v1457
  %v1459 = vrot.slane %v139, %v1458
  %1461 = vrot.lane.b32.xlu0 %v1459, 96
  %v1462 = vpop.permute.xlu0 %1461
  %v1464 = vmul.f32 %v1455, %v1462
  %v1465 = vadd.f32 %v1244, %v1464
  %v1466 = vrot.slane %v1347, 2
  %1467 = vrot.lane.b32.xlu0 %v1466, 32
  %v1468 = vpop.permute.xlu0 %1467
  %v1469 = vsel %vm44, %v1468, 0
  %1471 = vmatprep.subr.mxu0 0.0
  %1472 = vmatpush1.msra.mxu0 %v126
  %1473 = vmatprep.subr.mxu0 0.0
  %1474 = vmatpush1.msra.mxu0 %v127
  %1475 = vmatprep.subr.mxu0 0.0
  %1476 = vmatpush1.msra.mxu0 %v128
  %1477 = vmatprep.subr.mxu0 0.0
  %1478 = vmatpush1.msra.mxu0 %v129
  %1479 = vmatprep.subr.mxu0 0.0
  %1480 = vmatpush1.msra.mxu0 0.0
  %1481 = vmatprep.subr.mxu0 0.0
  %1482 = vmatpush1.msra.mxu0 0.0
  %1483 = vmatprep.subr.mxu0 0.0
  %1484 = vmatpush1.msra.mxu0 0.0
  %1485 = vmatprep.subr.mxu0 0.0
  %1486 = vmatpush1.msra.mxu0 0.0
  %1487 = vmatprep.subr.mxu0 0.0
  %1488 = vmatpush1.msra.mxu0 0.0
  %1489 = vmatprep.subr.mxu0 0.0
  %1490 = vmatpush1.msra.mxu0 0.0
  %1491 = vmatprep.subr.mxu0 0.0
  %1492 = vmatpush1.msra.mxu0 0.0
  %1493 = vmatprep.subr.mxu0 0.0
  %1494 = vmatpush1.msra.mxu0 0.0
  %1495 = vmatprep.subr.mxu0 0.0
  %1496 = vmatpush1.msra.mxu0 0.0
  %1497 = vmatprep.subr.mxu0 0.0
  %1498 = vmatpush1.msra.mxu0 0.0
  %1499 = vmatprep.subr.mxu0 0.0
  %1500 = vmatpush1.msra.mxu0 0.0
  %1501 = vmatprep.subr.mxu0 0.0
  %1502 = vmatpush1.msra.mxu0 0.0
  %1503 = vmatprep.subr.mxu0 0.0
  %1504 = vmatpush1.msra.mxu0 0.0
  %1505 = vmatprep.subr.mxu0 0.0
  %1506 = vmatpush1.msra.mxu0 0.0
  %1507 = vmatprep.subr.mxu0 0.0
  %1508 = vmatpush1.msra.mxu0 0.0
  %1509 = vmatprep.subr.mxu0 0.0
  %1510 = vmatpush1.msra.mxu0 0.0
  %1511 = vmatprep.subr.mxu0 0.0
  %1512 = vmatpush1.msra.mxu0 0.0
  %1513 = vmatprep.subr.mxu0 0.0
  %1514 = vmatpush1.msra.mxu0 0.0
  %1515 = vmatprep.subr.mxu0 0.0
  %1516 = vmatpush1.msra.mxu0 0.0
  %1517 = vmatprep.subr.mxu0 0.0
  %1518 = vmatpush1.msra.mxu0 0.0
  %1519 = vmatprep.subr.mxu0 0.0
  %1520 = vmatpush1.msra.mxu0 0.0
  %1521 = vmatprep.subr.mxu0 0.0
  %1522 = vmatpush1.msra.mxu0 0.0
  %1523 = vmatprep.subr.mxu0 0.0
  %1524 = vmatpush1.msra.mxu0 0.0
  %1525 = vmatprep.subr.mxu0 0.0
  %1526 = vmatpush1.msra.mxu0 0.0
  %1527 = vmatprep.subr.mxu0 0.0
  %1528 = vmatpush1.msra.mxu0 0.0
  %1529 = vmatprep.subr.mxu0 0.0
  %1530 = vmatpush1.msra.mxu0 0.0
  %1531 = vmatprep.subr.mxu0 0.0
  %1532 = vmatpush1.msra.mxu0 0.0
  %1533 = vmatprep.subr.mxu0 0.0
  %1534 = vmatpush1.msra.mxu0 0.0
  %1535 = vmatprep.mubr.f32.mxu0 0.0
  %1536 = vmatmul.mubr.f32.gmra.mrb[0].mxu0 %v1469
  %v1537 = vpop.f32.mrb[0].mxu0
  %v1538 = vadd.f32 0.0, %v1537
  %v1539 = vpop.f32.mrb[0].mxu0
  %1540 = vdwg.mxu0
  %v1542 = vrot.slane %v1538, 4
  %v1544 = vadd.f32 %v123, %v1542
  %v1545 = vxor.u32 %v1544, 2147483648
  %v1546 = vmul.f32 %v1545, 1.442695
  %v1547 = vpow.pop %v1546
  %v1548 = vadd.f32 %v1547, 1.0
  %v1549 = vrcp.pop %v1548
  %v1550 = vmul.f32 1.0, %v1549
  %v1551 = vtanh.pop %v1544
  %v1553 = vrot.slane %v1341, 6
  %v1555 = vmul.f32 %v1550, %v1553
  %1557 = vrot.lane.b32.xlu0 %v1551, 64
  %v1558 = vpop.permute.xlu0 %1557
  %v1560 = vmul.f32 %v1550, %v1558
  %1562 = vrot.lane.b32.xlu0 %v1560, 32
  %v1563 = vpop.permute.xlu0 %1562
  %v1565 = vadd.f32 %v1555, %v1563
  %v1566 = vtanh.pop %v1565
  %1568 = vrot.lane.b32.xlu0 %v1566, 64
  %v1569 = vpop.permute.xlu0 %1568
  %v1571 = vmul.f32 %v1550, %v1569
  %1573 = vrot.lane.b32.xlu0 %v1571, 32
  %v1574 = vpop.permute.xlu0 %1573
  %v1577 = vrot.slane %v1455, 4
  %1578 = vrot.lane.b32.xlu0 %v1577, 64
  %v1579 = vpop.permute.xlu0 %1578
  %v1581 = vsel %vm44, %v1574, %v1579
  %v1583 = vrot.slane %v1581, 4
  %v1584 = vsel %vm249, %v1583, 0
  %1586 = vmatprep.subr.mxu0 0.0
  %1587 = vmatpush1.msra.mxu0 %v130
  %1588 = vmatprep.subr.mxu0 0.0
  %1589 = vmatpush1.msra.mxu0 %v131
  %1590 = vmatprep.subr.mxu0 0.0
  %1591 = vmatpush1.msra.mxu0 %v132
  %1592 = vmatprep.subr.mxu0 0.0
  %1593 = vmatpush1.msra.mxu0 %v133
  %1594 = vmatprep.subr.mxu0 0.0
  %1595 = vmatpush1.msra.mxu0 %v134
  %1596 = vmatprep.subr.mxu0 0.0
  %1597 = vmatpush1.msra.mxu0 %v135
  %1598 = vmatprep.subr.mxu0 0.0
  %1599 = vmatpush1.msra.mxu0 %v136
  %1600 = vmatprep.subr.mxu0 0.0
  %1601 = vmatpush1.msra.mxu0 %v137
  %1602 = vmatprep.subr.mxu0 0.0
  %1603 = vmatpush1.msra.mxu0 0.0
  %1604 = vmatprep.subr.mxu0 0.0
  %1605 = vmatpush1.msra.mxu0 0.0
  %1606 = vmatprep.subr.mxu0 0.0
  %1607 = vmatpush1.msra.mxu0 0.0
  %1608 = vmatprep.subr.mxu0 0.0
  %1609 = vmatpush1.msra.mxu0 0.0
  %1610 = vmatprep.subr.mxu0 0.0
  %1611 = vmatpush1.msra.mxu0 0.0
  %1612 = vmatprep.subr.mxu0 0.0
  %1613 = vmatpush1.msra.mxu0 0.0
  %1614 = vmatprep.subr.mxu0 0.0
  %1615 = vmatpush1.msra.mxu0 0.0
  %1616 = vmatprep.subr.mxu0 0.0
  %1617 = vmatpush1.msra.mxu0 0.0
  %1618 = vmatprep.subr.mxu0 0.0
  %1619 = vmatpush1.msra.mxu0 0.0
  %1620 = vmatprep.subr.mxu0 0.0
  %1621 = vmatpush1.msra.mxu0 0.0
  %1622 = vmatprep.subr.mxu0 0.0
  %1623 = vmatpush1.msra.mxu0 0.0
  %1624 = vmatprep.subr.mxu0 0.0
  %1625 = vmatpush1.msra.mxu0 0.0
  %1626 = vmatprep.subr.mxu0 0.0
  %1627 = vmatpush1.msra.mxu0 0.0
  %1628 = vmatprep.subr.mxu0 0.0
  %1629 = vmatpush1.msra.mxu0 0.0
  %1630 = vmatprep.subr.mxu0 0.0
  %1631 = vmatpush1.msra.mxu0 0.0
  %1632 = vmatprep.subr.mxu0 0.0
  %1633 = vmatpush1.msra.mxu0 0.0
  %1634 = vmatprep.subr.mxu0 0.0
  %1635 = vmatpush1.msra.mxu0 0.0
  %1636 = vmatprep.subr.mxu0 0.0
  %1637 = vmatpush1.msra.mxu0 0.0
  %1638 = vmatprep.subr.mxu0 0.0
  %1639 = vmatpush1.msra.mxu0 0.0
  %1640 = vmatprep.subr.mxu0 0.0
  %1641 = vmatpush1.msra.mxu0 0.0
  %1642 = vmatprep.subr.mxu0 0.0
  %1643 = vmatpush1.msra.mxu0 0.0
  %1644 = vmatprep.subr.mxu0 0.0
  %1645 = vmatpush1.msra.mxu0 0.0
  %1646 = vmatprep.subr.mxu0 0.0
  %1647 = vmatpush1.msra.mxu0 0.0
  %1648 = vmatprep.subr.mxu0 0.0
  %1649 = vmatpush1.msra.mxu0 0.0
  %1650 = vmatprep.mubr.f32.mxu0 0.0
  %1651 = vmatmul.mubr.f32.gmra.mrb[0].mxu0 %v1584
  %v1652 = vpop.f32.mrb[0].mxu0
  %v1653 = vadd.f32 %v247, %v1652
  %v1654 = vpop.f32.mrb[0].mxu0
  %1655 = vdwg.mxu0
  %v1656 = vxor.u32 %v1653, 2147483648
  %v1657 = vmul.f32 %v1656, 1.442695
  %v1658 = vpow.pop %v1657
  %v1659 = vadd.f32 %v1658, 1.0
  %v1660 = vrcp.pop %v1659
  %v1661 = vmul.f32 1.0, %v1660
  %v1662 = vtanh.pop %v1653
  %v1663 = vmul.f32 %v1661, %v1449
  %1665 = vrot.lane.b32.xlu0 %v1662, 64
  %v1666 = vpop.permute.xlu0 %1665
  %v1668 = vmul.f32 %v1661, %v1666
  %1670 = vrot.lane.b32.xlu0 %v1668, 32
  %v1671 = vpop.permute.xlu0 %1670
  %v1673 = vadd.f32 %v1663, %v1671
  %v1674 = vtanh.pop %v1673
  %1676 = vrot.lane.b32.xlu0 %v1674, 64
  %v1677 = vpop.permute.xlu0 %1676
  %v1679 = vmul.f32 %v1661, %v1677
  %v1680 = vlaneseq
  %v1681 = vshrl.u32 %v1680, 7
  %v1682 = vsub.s32 6, %v1681
  %v1683 = vrot.slane %v139, %v1682
  %1685 = vrot.lane.b32.xlu0 %v1683, 96
  %v1686 = vpop.permute.xlu0 %1685
  %v1688 = vmul.f32 %v1679, %v1686
  %v1689 = vadd.f32 %v1465, %v1688
  %v1690 = vrot.slane %v1571, 4
  %1691 = vrot.lane.b32.xlu0 %v1690, 32
  %v1692 = vpop.permute.xlu0 %1691
  %v1693 = vsel %vm44, %v1692, 0
  %1695 = vmatprep.subr.mxu0 0.0
  %1696 = vmatpush1.msra.mxu0 %v126
  %1697 = vmatprep.subr.mxu0 0.0
  %1698 = vmatpush1.msra.mxu0 %v127
  %1699 = vmatprep.subr.mxu0 0.0
  %1700 = vmatpush1.msra.mxu0 %v128
  %1701 = vmatprep.subr.mxu0 0.0
  %1702 = vmatpush1.msra.mxu0 %v129
  %1703 = vmatprep.subr.mxu0 0.0
  %1704 = vmatpush1.msra.mxu0 0.0
  %1705 = vmatprep.subr.mxu0 0.0
  %1706 = vmatpush1.msra.mxu0 0.0
  %1707 = vmatprep.subr.mxu0 0.0
  %1708 = vmatpush1.msra.mxu0 0.0
  %1709 = vmatprep.subr.mxu0 0.0
  %1710 = vmatpush1.msra.mxu0 0.0
  %1711 = vmatprep.subr.mxu0 0.0
  %1712 = vmatpush1.msra.mxu0 0.0
  %1713 = vmatprep.subr.mxu0 0.0
  %1714 = vmatpush1.msra.mxu0 0.0
  %1715 = vmatprep.subr.mxu0 0.0
  %1716 = vmatpush1.msra.mxu0 0.0
  %1717 = vmatprep.subr.mxu0 0.0
  %1718 = vmatpush1.msra.mxu0 0.0
  %1719 = vmatprep.subr.mxu0 0.0
  %1720 = vmatpush1.msra.mxu0 0.0
  %1721 = vmatprep.subr.mxu0 0.0
  %1722 = vmatpush1.msra.mxu0 0.0
  %1723 = vmatprep.subr.mxu0 0.0
  %1724 = vmatpush1.msra.mxu0 0.0
  %1725 = vmatprep.subr.mxu0 0.0
  %1726 = vmatpush1.msra.mxu0 0.0
  %1727 = vmatprep.subr.mxu0 0.0
  %1728 = vmatpush1.msra.mxu0 0.0
  %1729 = vmatprep.subr.mxu0 0.0
  %1730 = vmatpush1.msra.mxu0 0.0
  %1731 = vmatprep.subr.mxu0 0.0
  %1732 = vmatpush1.msra.mxu0 0.0
  %1733 = vmatprep.subr.mxu0 0.0
  %1734 = vmatpush1.msra.mxu0 0.0
  %1735 = vmatprep.subr.mxu0 0.0
  %1736 = vmatpush1.msra.mxu0 0.0
  %1737 = vmatprep.subr.mxu0 0.0
  %1738 = vmatpush1.msra.mxu0 0.0
  %1739 = vmatprep.subr.mxu0 0.0
  %1740 = vmatpush1.msra.mxu0 0.0
  %1741 = vmatprep.subr.mxu0 0.0
  %1742 = vmatpush1.msra.mxu0 0.0
  %1743 = vmatprep.subr.mxu0 0.0
  %1744 = vmatpush1.msra.mxu0 0.0
  %1745 = vmatprep.subr.mxu0 0.0
  %1746 = vmatpush1.msra.mxu0 0.0
  %1747 = vmatprep.subr.mxu0 0.0
  %1748 = vmatpush1.msra.mxu0 0.0
  %1749 = vmatprep.subr.mxu0 0.0
  %1750 = vmatpush1.msra.mxu0 0.0
  %1751 = vmatprep.subr.mxu0 0.0
  %1752 = vmatpush1.msra.mxu0 0.0
  %1753 = vmatprep.subr.mxu0 0.0
  %1754 = vmatpush1.msra.mxu0 0.0
  %1755 = vmatprep.subr.mxu0 0.0
  %1756 = vmatpush1.msra.mxu0 0.0
  %1757 = vmatprep.subr.mxu0 0.0
  %1758 = vmatpush1.msra.mxu0 0.0
  %1759 = vmatprep.mubr.f32.mxu0 0.0
  %1760 = vmatmul.mubr.f32.gmra.mrb[0].mxu0 %v1693
  %v1761 = vpop.f32.mrb[0].mxu0
  %v1762 = vadd.f32 0.0, %v1761
  %v1763 = vpop.f32.mrb[0].mxu0
  %1764 = vdwg.mxu0
  %v1766 = vrot.slane %v1762, 2
  %v1768 = vadd.f32 %v123, %v1766
  %v1769 = vxor.u32 %v1768, 2147483648
  %v1770 = vmul.f32 %v1769, 1.442695
  %v1771 = vpow.pop %v1770
  %v1772 = vadd.f32 %v1771, 1.0
  %v1773 = vrcp.pop %v1772
  %v1774 = vmul.f32 1.0, %v1773
  %v1775 = vtanh.pop %v1768
  %v1777 = vrot.slane %v1565, 6
  %v1779 = vmul.f32 %v1774, %v1777
  %1781 = vrot.lane.b32.xlu0 %v1775, 64
  %v1782 = vpop.permute.xlu0 %1781
  %v1784 = vmul.f32 %v1774, %v1782
  %1786 = vrot.lane.b32.xlu0 %v1784, 32
  %v1787 = vpop.permute.xlu0 %1786
  %v1789 = vadd.f32 %v1779, %v1787
  %v1790 = vtanh.pop %v1789
  %1792 = vrot.lane.b32.xlu0 %v1790, 64
  %v1793 = vpop.permute.xlu0 %1792
  %v1795 = vmul.f32 %v1774, %v1793
  %1797 = vrot.lane.b32.xlu0 %v1795, 32
  %v1798 = vpop.permute.xlu0 %1797
  %v1801 = vrot.slane %v1679, 2
  %1802 = vrot.lane.b32.xlu0 %v1801, 64
  %v1803 = vpop.permute.xlu0 %1802
  %v1805 = vsel %vm44, %v1798, %v1803
  %v1807 = vrot.slane %v1805, 6
  %v1808 = vsel %vm249, %v1807, 0
  %1810 = vmatprep.subr.mxu0 0.0
  %1811 = vmatpush1.msra.mxu0 %v130
  %1812 = vmatprep.subr.mxu0 0.0
  %1813 = vmatpush1.msra.mxu0 %v131
  %1814 = vmatprep.subr.mxu0 0.0
  %1815 = vmatpush1.msra.mxu0 %v132
  %1816 = vmatprep.subr.mxu0 0.0
  %1817 = vmatpush1.msra.mxu0 %v133
  %1818 = vmatprep.subr.mxu0 0.0
  %1819 = vmatpush1.msra.mxu0 %v134
  %1820 = vmatprep.subr.mxu0 0.0
  %1821 = vmatpush1.msra.mxu0 %v135
  %1822 = vmatprep.subr.mxu0 0.0
  %1823 = vmatpush1.msra.mxu0 %v136
  %1824 = vmatprep.subr.mxu0 0.0
  %1825 = vmatpush1.msra.mxu0 %v137
  %1826 = vmatprep.subr.mxu0 0.0
  %1827 = vmatpush1.msra.mxu0 0.0
  %1828 = vmatprep.subr.mxu0 0.0
  %1829 = vmatpush1.msra.mxu0 0.0
  %1830 = vmatprep.subr.mxu0 0.0
  %1831 = vmatpush1.msra.mxu0 0.0
  %1832 = vmatprep.subr.mxu0 0.0
  %1833 = vmatpush1.msra.mxu0 0.0
  %1834 = vmatprep.subr.mxu0 0.0
  %1835 = vmatpush1.msra.mxu0 0.0
  %1836 = vmatprep.subr.mxu0 0.0
  %1837 = vmatpush1.msra.mxu0 0.0
  %1838 = vmatprep.subr.mxu0 0.0
  %1839 = vmatpush1.msra.mxu0 0.0
  %1840 = vmatprep.subr.mxu0 0.0
  %1841 = vmatpush1.msra.mxu0 0.0
  %1842 = vmatprep.subr.mxu0 0.0
  %1843 = vmatpush1.msra.mxu0 0.0
  %1844 = vmatprep.subr.mxu0 0.0
  %1845 = vmatpush1.msra.mxu0 0.0
  %1846 = vmatprep.subr.mxu0 0.0
  %1847 = vmatpush1.msra.mxu0 0.0
  %1848 = vmatprep.subr.mxu0 0.0
  %1849 = vmatpush1.msra.mxu0 0.0
  %1850 = vmatprep.subr.mxu0 0.0
  %1851 = vmatpush1.msra.mxu0 0.0
  %1852 = vmatprep.subr.mxu0 0.0
  %1853 = vmatpush1.msra.mxu0 0.0
  %1854 = vmatprep.subr.mxu0 0.0
  %1855 = vmatpush1.msra.mxu0 0.0
  %1856 = vmatprep.subr.mxu0 0.0
  %1857 = vmatpush1.msra.mxu0 0.0
  %1858 = vmatprep.subr.mxu0 0.0
  %1859 = vmatpush1.msra.mxu0 0.0
  %1860 = vmatprep.subr.mxu0 0.0
  %1861 = vmatpush1.msra.mxu0 0.0
  %1862 = vmatprep.subr.mxu0 0.0
  %1863 = vmatpush1.msra.mxu0 0.0
  %1864 = vmatprep.subr.mxu0 0.0
  %1865 = vmatpush1.msra.mxu0 0.0
  %1866 = vmatprep.subr.mxu0 0.0
  %1867 = vmatpush1.msra.mxu0 0.0
  %1868 = vmatprep.subr.mxu0 0.0
  %1869 = vmatpush1.msra.mxu0 0.0
  %1870 = vmatprep.subr.mxu0 0.0
  %1871 = vmatpush1.msra.mxu0 0.0
  %1872 = vmatprep.subr.mxu0 0.0
  %1873 = vmatpush1.msra.mxu0 0.0
  %1874 = vmatprep.mubr.f32.mxu0 0.0
  %1875 = vmatmul.mubr.f32.gmra.mrb[0].mxu0 %v1808
  %v1876 = vpop.f32.mrb[0].mxu0
  %v1877 = vadd.f32 %v247, %v1876
  %v1878 = vpop.f32.mrb[0].mxu0
  %1879 = vdwg.mxu0
  %v1880 = vxor.u32 %v1877, 2147483648
  %v1881 = vmul.f32 %v1880, 1.442695
  %v1882 = vpow.pop %v1881
  %v1883 = vadd.f32 %v1882, 1.0
  %v1884 = vrcp.pop %v1883
  %v1885 = vmul.f32 1.0, %v1884
  %v1886 = vtanh.pop %v1877
  %v1887 = vmul.f32 %v1885, %v1673
  %1889 = vrot.lane.b32.xlu0 %v1886, 64
  %v1890 = vpop.permute.xlu0 %1889
  %v1892 = vmul.f32 %v1885, %v1890
  %1894 = vrot.lane.b32.xlu0 %v1892, 32
  %v1895 = vpop.permute.xlu0 %1894
  %v1897 = vadd.f32 %v1887, %v1895
  %v1898 = vtanh.pop %v1897
  %1900 = vrot.lane.b32.xlu0 %v1898, 64
  %v1901 = vpop.permute.xlu0 %1900
  %v1903 = vmul.f32 %v1885, %v1901
  %v1904 = vlaneseq
  %v1905 = vshrl.u32 %v1904, 7
  %v1906 = vsub.s32 7, %v1905
  %v1907 = vrot.slane %v139, %v1906
  %1909 = vrot.lane.b32.xlu0 %v1907, 96
  %v1910 = vpop.permute.xlu0 %1909
  %v1912 = vmul.f32 %v1903, %v1910
  %v1913 = vadd.f32 %v1689, %v1912
  %1915 = vrot.lane.b32.xlu0 %v1913, 32
  %v1916 = vpop.permute.xlu0 %1915
  %vm1918 = vcmask 254976
  %v1919 = vsel %vm1918, %v1916, 0.0
  %1920 = vadd.xlane.f32.xlu0 %v1919
  %v1921 = vpop.xlane.xlu0 %1920
  %v1922 = vld [vmem:[#allocation2] sm:$0x1]
  %v1924 = vlaneseq
  %v1925 = vshrl.u32 %v1924, 7
  %v1926 = vsub.s32 0, %v1925
  %v1927 = vrot.slane %v1922, %v1926
  %v1929 = vadd.f32 %v1921, %v1927
  %v1930 = vxor.u32 %v1929, 2147483648
  %v1931 = vmul.f32 %v1930, 1.442695
  %v1932 = vpow.pop %v1931
  %v1933 = vadd.f32 %v1932, 1.0
  %v1934 = vrcp.pop %v1933
  %v1935 = vmul.f32 1.0, %v1934
  %1937 = vset.pattern.permute.xlu0 0
  %1938 = vperm.xlu0 %1937, %v1935
  %v1939 = vpop.permute.xlu0 %1938
  %1941 = vst [vmem:[%s8] sm:$0x3] %v1939
  // Predicated region
  $region34: #{lstm_net_forward.1} parent=0 // pred_check
    _
  $region35: #{lstm_net_forward.1} parent=0 // pred_check_branch
    %1943 = sbr.rel (0) target = $region37
  $region36: #{lstm_net_forward.1} parent=0 // pred_region
    _
  $region37: #{lstm_net_forward.1} parent=0 // pred_fallthru
    _
  // Predicated region
  $region38: #{lstm_net_forward.1} parent=0 // pred_check
    _
  $region39: #{lstm_net_forward.1} parent=0 // pred_check_branch
    %1945 = sbr.rel (0) target = $region41
  $region40: #{lstm_net_forward.1} parent=0 // pred_region
    _
  $region41: #{lstm_net_forward.1} parent=0 // pred_fallthru
    _

</llo_original>
